<compile_context>
chip_gen: v6e
topology: v6e:2x2x1
jax: 0.10.0
libtpu: 0.0.40
codegen_flags: <defaults>
</compile_context>

<pallas_src>
import functools

import jax
import jax.numpy as jnp
from jax import lax
from jax.experimental import pallas as pl
from jax.experimental.pallas import tpu as pltpu

TAU = 2.0
THRESH = 1.0          # every LIF in the spec (incl. attn_lif) uses threshold=1.0
BN_EPS = 1e-5
ATTN_SCALE = 0.125    # Spikformer fixed scale (independent of head_dim)


# ---------------------------------------------------------------------------
# LIF single timestep on a (view of a) membrane ref.
# ---------------------------------------------------------------------------
def _lif_step(mem_ref, y, out_dtype):
    mem = mem_ref[...]                                 # single load
    mem = mem + (y - mem) * (1.0 / TAU)
    spiked = mem >= THRESH
    mem_ref[...] = jnp.where(spiked, 0.0, mem)         # hard reset
    return spiked.astype(out_dtype)                    # spikes are exact in bf16


# ---------------------------------------------------------------------------
# Fused Block kernel: one grid step = one (batch, timestep), row-tiled inside.
# ---------------------------------------------------------------------------
def _block_kernel(
    x_ref, mask_ref,
    qkv_w_ref, qkv_shift_ref,
    proj_w_ref, proj_shift_ref,
    fc1_w_ref, fc1_shift_ref,
    fc2_w_ref, fc2_shift_ref,
    out_ref, v_ref,
    qkv_mem, attn_mem, proj_mem, fc1_mem, fc2_mem, q_buf,
    *, tile_n, n_tiles,
):
    t = pl.program_id(1)
    C = out_ref.shape[-1]

    @pl.when(t == 0)
    def _():
        qkv_mem[...] = jnp.zeros_like(qkv_mem)
        attn_mem[...] = jnp.zeros_like(attn_mem)
        proj_mem[...] = jnp.zeros_like(proj_mem)
        fc1_mem[...] = jnp.zeros_like(fc1_mem)
        fc2_mem[...] = jnp.zeros_like(fc2_mem)

    # ---- phase 1: QKV matmul + LIF per row tile, accumulate kv = k^T v -----
    kv = jnp.zeros((C, C), jnp.float32)
    for r in range(n_tiles):
        rows = pl.ds(r * tile_n, tile_n)
        x_r = x_ref[0, rows, :]                                  # (tn, C) f32
        y = jnp.dot(x_r.astype(jnp.bfloat16), qkv_w_ref[...],
                    preferred_element_type=jnp.float32) + qkv_shift_ref[...]
        qkv_s = _lif_step(qkv_mem.at[rows, :], y, jnp.bfloat16)  # (tn, 3C) 0/1
        q_s = qkv_s[:, :C]
        k_s = qkv_s[:, C:2 * C]
        v_s = qkv_s[:, 2 * C:]
        q_buf[rows, :] = q_s                                     # bf16 scratch
        v_ref[0, rows, :] = v_s                                  # bf16 output (= v spikes)
        # kv[c1, c2] = sum_n k[n, c1] * v[n, c2]   (contract axis 0 vs axis 0)
        kv = kv + lax.dot_general(k_s, v_s, (((0,), (0,)), ((), ())),
                                  preferred_element_type=jnp.float32)

    # Block-diagonal head mask (with the 0.125 scale folded in), f32 — kv holds
    # integer counts up to N which are not exact in bf16.
    attn_w = kv * mask_ref[...]                                  # (C, C) f32

    # ---- phase 2: attention -> proj -> residual -> MLP -> residual ----------
    for r in range(n_tiles):
        rows = pl.ds(r * tile_n, tile_n)
        q_s = q_buf[rows, :].astype(jnp.float32)
        attn = jnp.dot(q_s, attn_w, preferred_element_type=jnp.float32)
        a_s = _lif_step(attn_mem.at[rows, :], attn, jnp.bfloat16)

        z = jnp.dot(a_s, proj_w_ref[...],
                    preferred_element_type=jnp.float32) + proj_shift_ref[...]
        proj_s = _lif_step(proj_mem.at[rows, :], z, jnp.float32)

        x1 = x_ref[0, rows, :] + proj_s                          # residual 1

        h1 = jnp.dot(x1.astype(jnp.bfloat16), fc1_w_ref[...],
                     preferred_element_type=jnp.float32) + fc1_shift_ref[...]
        h1_s = _lif_step(fc1_mem.at[rows, :], h1, jnp.bfloat16)
        h2 = jnp.dot(h1_s, fc2_w_ref[...],
                     preferred_element_type=jnp.float32) + fc2_shift_ref[...]
        h2_s = _lif_step(fc2_mem.at[rows, :], h2, jnp.float32)

        out_ref[0, rows, :] = x1 + h2_s                          # residual 2


def _pick_row_tile(n, max_tile=512):
    """Largest divisor of n that is <= max_tile and a multiple of 8."""
    if n <= max_tile:
        return n
    for cand in range(max_tile, 7, -1):
        if n % cand == 0 and cand % 8 == 0:
            return cand
    return n


def fused_block(x_cl, head_mask, p, *, B, N):
    """x_cl: (T, B*N, C) channel-last. Returns (out f32, v-spikes bf16)."""
    T, M, C = x_cl.shape
    assert M == B * N
    Ch = p["fc1_w"].shape[1]
    tile_n = _pick_row_tile(N)
    n_tiles = N // tile_n

    def wspec(shape):
        return pl.BlockSpec(shape, lambda b, t: (0,) * len(shape))

    xspec = pl.BlockSpec((1, N, C), lambda b, t: (t, b, 0))

    # Explicit VMEM budget (review item): scratch + pipelined blocks + weights.
    f32b, bf16b = 4, 2
    est = (
        N * 3 * C * f32b + 3 * N * C * f32b + N * Ch * f32b + N * C * bf16b     # scratch
        + 2 * (2 * N * C * f32b + N * C * bf16b)                                 # x / out / v buffers
        + 2 * ((C * 3 * C + C * C + C * Ch + Ch * C) * bf16b
               + (3 * C + C + Ch + C) * f32b + C * C * f32b)                     # weights/shifts/mask
    )
    vmem_limit = int(min(max(2 * est + (8 << 20), 32 << 20), 48 << 20))

    kernel = functools.partial(_block_kernel, tile_n=tile_n, n_tiles=n_tiles)
    return pl.pallas_call(
        kernel,
        out_shape=(
            jax.ShapeDtypeStruct((T, M, C), jnp.float32),
            jax.ShapeDtypeStruct((T, M, C), jnp.bfloat16),    # v spikes, 0/1 exact
        ),
        grid_spec=pltpu.PrefetchScalarGridSpec(
            num_scalar_prefetch=0,
            grid=(B, T),
            in_specs=[
                xspec,
                wspec((C, C)),                                 # scaled head mask
                wspec((C, 3 * C)), wspec((1, 3 * C)),
                wspec((C, C)), wspec((1, C)),
                wspec((C, Ch)), wspec((1, Ch)),
                wspec((Ch, C)), wspec((1, C)),
            ],
            out_specs=[xspec, xspec],
            scratch_shapes=[
                pltpu.VMEM((N, 3 * C), jnp.float32),   # q/k/v membranes
                pltpu.VMEM((N, C), jnp.float32),       # attn_lif membrane
                pltpu.VMEM((N, C), jnp.float32),       # proj_lif membrane
                pltpu.VMEM((N, Ch), jnp.float32),      # fc1_lif membrane
                pltpu.VMEM((N, C), jnp.float32),       # fc2_lif membrane
                pltpu.VMEM((N, C), jnp.bfloat16),      # q spike buffer (phase 1 -> 2)
            ],
        ),
        compiler_params=pltpu.CompilerParams(
            dimension_semantics=("parallel", "arbitrary"),
            vmem_limit_bytes=vmem_limit),
    )(
        x_cl, head_mask,
        p["qkv_w"], p["qkv_shift"],
        p["proj_w"], p["proj_shift"],
        p["fc1_w"], p["fc1_shift"],
        p["fc2_w"], p["fc2_shift"],
    )


# ---------------------------------------------------------------------------
# Module-level glue.  NOTE: when chaining Blocks, keep the (T, B*N, C) layout
# and call fused_block directly to avoid per-Block NCHW<->channel-last HBM
# round trips; block_forward only exists to match the PyTorch interface.
# ---------------------------------------------------------------------------
def block_forward(x, params, num_heads):
    T, B, C, H, W = x.shape
    N = H * W
    Dh = C // num_heads
    head_of = jnp.arange(C, dtype=jnp.int32) // Dh
    head_mask = (head_of[:, None] == head_of[None, :]).astype(jnp.float32) * ATTN_SCALE

    x_cl = x.reshape(T, B, C, N).transpose(0, 1, 3, 2).reshape(T, B * N, C)
    out_cl, v_cl = fused_block(x_cl, head_mask, params, B=B, N=N)
    out = out_cl.reshape(T, B, N, C).transpose(0, 1, 3, 2).reshape(T, B, C, H, W)
    # torch returns v as (T, B, heads, N, Dh); spikes are 0/1 so bf16 is exact.
    attn = v_cl.reshape(T, B, N, num_heads, Dh).transpose(0, 1, 3, 2, 4)
    return out, attn


# ---------------------------------------------------------------------------
# Deterministic parameter construction. BN (inference) + conv bias folded:
#   scale -> into weight columns (bf16 MXU weights);  shift -> kept as f32 add.
# ---------------------------------------------------------------------------
def _fold_bn(gamma, beta, mean, var, bias=None):
    scale = gamma / jnp.sqrt(var + BN_EPS)
    b = bias if bias is not None else jnp.zeros_like(mean)
    shift = (b - mean) * scale + beta
    return scale, shift.reshape(1, -1).astype(jnp.float32)


def _make_layer(key, cin, cout, with_bias):
    kw, kb, kg, kbe, km = jax.random.split(key, 5)
    w_torch = jax.random.normal(kw, (cout, cin), jnp.float32) * (1.5 / jnp.sqrt(cin))
    bias = jax.random.normal(kb, (cout,), jnp.float32) * 0.1 if with_bias else None
    gamma = 1.0 + 0.1 * jax.random.normal(kg, (cout,), jnp.float32)
    beta = 0.2 * jax.random.normal(kbe, (cout,), jnp.float32)
    mean = 0.1 * jax.random.normal(km, (cout,), jnp.float32)
    var = jnp.ones((cout,), jnp.float32)
    scale, shift = _fold_bn(gamma, beta, mean, var, bias)
    w = (w_torch.T * scale[None, :]).astype(jnp.bfloat16)   # (Cin, Cout), BN-scaled, bf16
    return w, shift


def init_block_params(key, dim, mlp_hidden):
    keys = jax.random.split(key, 6)
    q_w, q_b = _make_layer(keys[0], dim, dim, with_bias=False)
    k_w, k_b = _make_layer(keys[1], dim, dim, with_bias=False)
    v_w, v_b = _make_layer(keys[2], dim, dim, with_bias=False)
    p_w, p_b = _make_layer(keys[3], dim, dim, with_bias=True)
    f1_w, f1_b = _make_layer(keys[4], dim, mlp_hidden, with_bias=True)
    f2_w, f2_b = _make_layer(keys[5], mlp_hidden, dim, with_bias=True)
    return {
        "qkv_w": jnp.concatenate([q_w, k_w, v_w], axis=1),       # (C, 3C) bf16
        "qkv_shift": jnp.concatenate([q_b, k_b, v_b], axis=1),   # (1, 3C) f32
        "proj_w": p_w, "proj_shift": p_b,
        "fc1_w": f1_w, "fc1_shift": f1_b,
        "fc2_w": f2_w, "fc2_shift": f2_b,
    }


if __name__ == "__main__":
    # Small shapes consistent with the module: step=4, batch=2, dim=32,
    # num_heads=4 (head_dim=8), spatial 8x8, mlp_ratio=4 -> hidden=128.
    T, B, C, H, W = 4, 2, 32, 8, 8
    NUM_HEADS = 4
    MLP_HIDDEN = int(C * 4.0)

    key = jax.random.PRNGKey(0)
    kx, kp = jax.random.split(key)
    x = jax.random.normal(kx, (T, B, C, H, W), jnp.float32)
    params = init_block_params(kp, C, MLP_HIDDEN)

    fwd = jax.jit(functools.partial(block_forward, num_heads=NUM_HEADS))
    out, attn = fwd(x, params)
    jax.block_until_ready((out, attn))

    assert out.shape == (T, B, C, H, W), out.shape
    assert attn.shape == (T, B, NUM_HEADS, H * W, C // NUM_HEADS), attn.shape
    assert bool(jnp.isfinite(out).all())
    print("KERNEL_OK")
</pallas_src>

<mosaic_0001>
module attributes {stable_mosaic.version = 11 : i64} {
  func.func @_block_kernel(%arg0: i32, %arg1: i32, %arg2: memref<1x64x32xf32, #tpu.memory_space<vmem>>, %arg3: memref<32x32xf32, #tpu.memory_space<vmem>>, %arg4: memref<32x96xbf16, #tpu.memory_space<vmem>>, %arg5: memref<1x96xf32, #tpu.memory_space<vmem>>, %arg6: memref<32x32xbf16, #tpu.memory_space<vmem>>, %arg7: memref<1x32xf32, #tpu.memory_space<vmem>>, %arg8: memref<32x128xbf16, #tpu.memory_space<vmem>>, %arg9: memref<1x128xf32, #tpu.memory_space<vmem>>, %arg10: memref<128x32xbf16, #tpu.memory_space<vmem>>, %arg11: memref<1x32xf32, #tpu.memory_space<vmem>>, %arg12: memref<1x64x32xf32, #tpu.memory_space<vmem>>, %arg13: memref<1x64x32xbf16, #tpu.memory_space<vmem>>, %arg14: memref<64x96xf32, #tpu.memory_space<vmem>>, %arg15: memref<64x32xf32, #tpu.memory_space<vmem>>, %arg16: memref<64x32xf32, #tpu.memory_space<vmem>>, %arg17: memref<64x128xf32, #tpu.memory_space<vmem>>, %arg18: memref<64x32xf32, #tpu.memory_space<vmem>>, %arg19: memref<64x32xbf16, #tpu.memory_space<vmem>>) attributes {dimension_semantics = [#tpu.dimension_semantics<parallel>, #tpu.dimension_semantics<arbitrary>], iteration_bounds = array<i64: 2, 4>, scalar_prefetch = 0 : i64, scratch_operands = 6 : i64, tpu.core_type = #tpu.core_type<tc>, window_params = [{transform_indices = @transform_0, window_bounds = array<i64: 1, 64, 32>}, {pipeline_mode = #tpu.pipeline_mode<synchronous>, transform_indices = @transform_1, window_bounds = array<i64: 32, 32>}, {pipeline_mode = #tpu.pipeline_mode<synchronous>, transform_indices = @transform_2, window_bounds = array<i64: 32, 96>}, {pipeline_mode = #tpu.pipeline_mode<synchronous>, transform_indices = @transform_3, window_bounds = array<i64: 1, 96>}, {pipeline_mode = #tpu.pipeline_mode<synchronous>, transform_indices = @transform_4, window_bounds = array<i64: 32, 32>}, {pipeline_mode = #tpu.pipeline_mode<synchronous>, transform_indices = @transform_5, window_bounds = array<i64: 1, 32>}, {pipeline_mode = #tpu.pipeline_mode<synchronous>, transform_indices = @transform_6, window_bounds = array<i64: 32, 128>}, {pipeline_mode = #tpu.pipeline_mode<synchronous>, transform_indices = @transform_7, window_bounds = array<i64: 1, 128>}, {pipeline_mode = #tpu.pipeline_mode<synchronous>, transform_indices = @transform_8, window_bounds = array<i64: 128, 32>}, {pipeline_mode = #tpu.pipeline_mode<synchronous>, transform_indices = @transform_9, window_bounds = array<i64: 1, 32>}, {transform_indices = @transform_10, window_bounds = array<i64: 1, 64, 32>}, {transform_indices = @transform_11, window_bounds = array<i64: 1, 64, 32>}]} {
    %c0_i32 = arith.constant 0 : i32
    %0 = arith.cmpi eq, %arg1, %c0_i32 : i32
    %1 = arith.extui %0 : i1 to i32
    %c0_i32_0 = arith.constant 0 : i32
    %2 = arith.cmpi ne, %1, %c0_i32_0 : i32
    scf.if %2 {
      %cst_75 = arith.constant 0.000000e+00 : f32
      %112 = vector.broadcast %cst_75 : f32 to vector<64x96xf32>
      %c0_76 = arith.constant 0 : index
      %c0_77 = arith.constant 0 : index
      %113 = vector.load %arg14[%c0_76, %c0_77] : memref<64x96xf32, #tpu.memory_space<vmem>>, vector<64x96xf32>
      tpu.vector_store %arg14[%c0_76, %c0_77], %112 {strides = array<i32>} : memref<64x96xf32, #tpu.memory_space<vmem>>, vector<64x96xf32>,
      %cst_78 = arith.constant 0.000000e+00 : f32
      %114 = vector.broadcast %cst_78 : f32 to vector<64x32xf32>
      %c0_79 = arith.constant 0 : index
      %c0_80 = arith.constant 0 : index
      %115 = vector.load %arg15[%c0_79, %c0_80] : memref<64x32xf32, #tpu.memory_space<vmem>>, vector<64x32xf32>
      tpu.vector_store %arg15[%c0_79, %c0_80], %114 {strides = array<i32>} : memref<64x32xf32, #tpu.memory_space<vmem>>, vector<64x32xf32>,
      %cst_81 = arith.constant 0.000000e+00 : f32
      %116 = vector.broadcast %cst_81 : f32 to vector<64x32xf32>
      %c0_82 = arith.constant 0 : index
      %c0_83 = arith.constant 0 : index
      %117 = vector.load %arg16[%c0_82, %c0_83] : memref<64x32xf32, #tpu.memory_space<vmem>>, vector<64x32xf32>
      tpu.vector_store %arg16[%c0_82, %c0_83], %116 {strides = array<i32>} : memref<64x32xf32, #tpu.memory_space<vmem>>, vector<64x32xf32>,
      %cst_84 = arith.constant 0.000000e+00 : f32
      %118 = vector.broadcast %cst_84 : f32 to vector<64x128xf32>
      %c0_85 = arith.constant 0 : index
      %c0_86 = arith.constant 0 : index
      %119 = vector.load %arg17[%c0_85, %c0_86] : memref<64x128xf32, #tpu.memory_space<vmem>>, vector<64x128xf32>
      tpu.vector_store %arg17[%c0_85, %c0_86], %118 {strides = array<i32>} : memref<64x128xf32, #tpu.memory_space<vmem>>, vector<64x128xf32>,
      %cst_87 = arith.constant 0.000000e+00 : f32
      %120 = vector.broadcast %cst_87 : f32 to vector<64x32xf32>
      %c0_88 = arith.constant 0 : index
      %c0_89 = arith.constant 0 : index
      %121 = vector.load %arg18[%c0_88, %c0_89] : memref<64x32xf32, #tpu.memory_space<vmem>>, vector<64x32xf32>
      tpu.vector_store %arg18[%c0_88, %c0_89], %120 {strides = array<i32>} : memref<64x32xf32, #tpu.memory_space<vmem>>, vector<64x32xf32>,
    } else {
    }
    %cst = arith.constant 0.000000e+00 : f32
    %3 = vector.broadcast %cst : f32 to vector<32x32xf32>
    %c0 = arith.constant 0 : index
    %c0_1 = arith.constant 0 : index
    %c0_2 = arith.constant 0 : index
    %4 = vector.load %arg2[%c0, %c0_1, %c0_2] : memref<1x64x32xf32, #tpu.memory_space<vmem>>, vector<1x64x32xf32>
    %5 = vector.shape_cast %4 : vector<1x64x32xf32> to vector<64x32xf32>
    %6 = arith.truncf %5 : vector<64x32xf32> to vector<64x32xbf16>
    %c0_3 = arith.constant 0 : index
    %c0_4 = arith.constant 0 : index
    %7 = vector.load %arg4[%c0_3, %c0_4] : memref<32x96xbf16, #tpu.memory_space<vmem>>, vector<32x96xbf16>
    %cst_5 = arith.constant dense<0.000000e+00> : vector<64x96xf32>
    %8 = tpu.matmul %6, %7, %cst_5 {dimension_numbers = #tpu.dot_dimension_numbers<[1], [0], [0], [1], [0, 0, 1, 1], [], []>} : vector<64x32xbf16>, vector<32x96xbf16>, vector<64x96xf32> -> vector<64x96xf32>
    %c0_6 = arith.constant 0 : index
    %c0_7 = arith.constant 0 : index
    %9 = vector.load %arg5[%c0_6, %c0_7] : memref<1x96xf32, #tpu.memory_space<vmem>>, vector<1x96xf32>
    %10 = vector.broadcast %9 : vector<1x96xf32> to vector<64x96xf32>
    %11 = arith.addf %8, %10 : vector<64x96xf32>
    %c0_8 = arith.constant 0 : index
    %c0_9 = arith.constant 0 : index
    %12 = vector.load %arg14[%c0_8, %c0_9] : memref<64x96xf32, #tpu.memory_space<vmem>>, vector<64x96xf32>
    %13 = arith.subf %11, %12 : vector<64x96xf32>
    %cst_10 = arith.constant 5.000000e-01 : f32
    %14 = vector.broadcast %cst_10 : f32 to vector<64x96xf32>
    %15 = arith.mulf %13, %14 : vector<64x96xf32>
    %16 = arith.addf %12, %15 : vector<64x96xf32>
    %cst_11 = arith.constant 1.000000e+00 : f32
    %17 = vector.broadcast %cst_11 : f32 to vector<64x96xf32>
    %18 = arith.cmpf oge, %16, %17 : vector<64x96xf32>
    %cst_12 = arith.constant 0.000000e+00 : f32
    %19 = vector.broadcast %cst_12 : f32 to vector<64x96xf32>
    %20 = arith.select %18, %19, %16 : vector<64x96xi1>, vector<64x96xf32>
    %c0_13 = arith.constant 0 : index
    %c0_14 = arith.constant 0 : index
    %21 = vector.load %arg14[%c0_13, %c0_14] : memref<64x96xf32, #tpu.memory_space<vmem>>, vector<64x96xf32>
    tpu.vector_store %arg14[%c0_13, %c0_14], %20 {strides = array<i32>} : memref<64x96xf32, #tpu.memory_space<vmem>>, vector<64x96xf32>,
    %22 = arith.extui %18 : vector<64x96xi1> to vector<64x96xi32>
    %23 = arith.sitofp %22 : vector<64x96xi32> to vector<64x96xf32>
    %24 = arith.truncf %23 : vector<64x96xf32> to vector<64x96xbf16>
    %25 = vector.extract_strided_slice %24 {offsets = [0, 0], sizes = [64, 32], strides = [1, 1]} : vector<64x96xbf16> to vector<64x32xbf16>
    %26 = vector.extract_strided_slice %24 {offsets = [0, 32], sizes = [64, 32], strides = [1, 1]} : vector<64x96xbf16> to vector<64x32xbf16>
    %27 = vector.extract_strided_slice %24 {offsets = [0, 64], sizes = [64, 32], strides = [1, 1]} : vector<64x96xbf16> to vector<64x32xbf16>
    %c0_15 = arith.constant 0 : index
    %c0_16 = arith.constant 0 : index
    %28 = vector.load %arg19[%c0_15, %c0_16] : memref<64x32xbf16, #tpu.memory_space<vmem>>, vector<64x32xbf16>
    tpu.vector_store %arg19[%c0_15, %c0_16], %25 {strides = array<i32>} : memref<64x32xbf16, #tpu.memory_space<vmem>>, vector<64x32xbf16>,
    %c0_17 = arith.constant 0 : index
    %c0_18 = arith.constant 0 : index
    %c0_19 = arith.constant 0 : index
    %29 = vector.load %arg13[%c0_17, %c0_18, %c0_19] : memref<1x64x32xbf16, #tpu.memory_space<vmem>>, vector<1x64x32xbf16>
    %30 = vector.shape_cast %29 : vector<1x64x32xbf16> to vector<64x32xbf16>
    %31 = vector.shape_cast %27 : vector<64x32xbf16> to vector<1x64x32xbf16>
    tpu.vector_store %arg13[%c0_17, %c0_18, %c0_19], %31 {strides = array<i32>} : memref<1x64x32xbf16, #tpu.memory_space<vmem>>, vector<1x64x32xbf16>,
    %cst_20 = arith.constant dense<0.000000e+00> : vector<32x32xf32>
    %32 = tpu.matmul %26, %27, %cst_20 {dimension_numbers = #tpu.dot_dimension_numbers<[0], [0], [1], [1], [0, 1, 1, 1], [], []>} : vector<64x32xbf16>, vector<64x32xbf16>, vector<32x32xf32> -> vector<32x32xf32>
    %33 = arith.addf %3, %32 : vector<32x32xf32>
    %c0_21 = arith.constant 0 : index
    %c0_22 = arith.constant 0 : index
    %34 = vector.load %arg3[%c0_21, %c0_22] : memref<32x32xf32, #tpu.memory_space<vmem>>, vector<32x32xf32>
    %35 = arith.mulf %33, %34 : vector<32x32xf32>
    %c0_23 = arith.constant 0 : index
    %c0_24 = arith.constant 0 : index
    %36 = vector.load %arg19[%c0_23, %c0_24] : memref<64x32xbf16, #tpu.memory_space<vmem>>, vector<64x32xbf16>
    %37 = arith.extf %36 : vector<64x32xbf16> to vector<64x32xf32>
    %cst_25 = arith.constant dense<0.000000e+00> : vector<64x32xf32>
    %38 = tpu.matmul %37, %35, %cst_25 {dimension_numbers = #tpu.dot_dimension_numbers<[1], [0], [0], [1], [0, 0, 1, 1], [], []>} : vector<64x32xf32>, vector<32x32xf32>, vector<64x32xf32> -> vector<64x32xf32>
    %c0_26 = arith.constant 0 : index
    %c0_27 = arith.constant 0 : index
    %39 = vector.load %arg15[%c0_26, %c0_27] : memref<64x32xf32, #tpu.memory_space<vmem>>, vector<64x32xf32>
    %40 = arith.subf %38, %39 : vector<64x32xf32>
    %cst_28 = arith.constant 5.000000e-01 : f32
    %41 = vector.broadcast %cst_28 : f32 to vector<64x32xf32>
    %42 = arith.mulf %40, %41 : vector<64x32xf32>
    %43 = arith.addf %39, %42 : vector<64x32xf32>
    %cst_29 = arith.constant 1.000000e+00 : f32
    %44 = vector.broadcast %cst_29 : f32 to vector<64x32xf32>
    %45 = arith.cmpf oge, %43, %44 : vector<64x32xf32>
    %cst_30 = arith.constant 0.000000e+00 : f32
    %46 = vector.broadcast %cst_30 : f32 to vector<64x32xf32>
    %47 = arith.select %45, %46, %43 : vector<64x32xi1>, vector<64x32xf32>
    %c0_31 = arith.constant 0 : index
    %c0_32 = arith.constant 0 : index
    %48 = vector.load %arg15[%c0_31, %c0_32] : memref<64x32xf32, #tpu.memory_space<vmem>>, vector<64x32xf32>
    tpu.vector_store %arg15[%c0_31, %c0_32], %47 {strides = array<i32>} : memref<64x32xf32, #tpu.memory_space<vmem>>, vector<64x32xf32>,
    %49 = arith.extui %45 : vector<64x32xi1> to vector<64x32xi32>
    %50 = arith.sitofp %49 : vector<64x32xi32> to vector<64x32xf32>
    %51 = arith.truncf %50 : vector<64x32xf32> to vector<64x32xbf16>
    %c0_33 = arith.constant 0 : index
    %c0_34 = arith.constant 0 : index
    %52 = vector.load %arg6[%c0_33, %c0_34] : memref<32x32xbf16, #tpu.memory_space<vmem>>, vector<32x32xbf16>
    %cst_35 = arith.constant dense<0.000000e+00> : vector<64x32xf32>
    %53 = tpu.matmul %51, %52, %cst_35 {dimension_numbers = #tpu.dot_dimension_numbers<[1], [0], [0], [1], [0, 0, 1, 1], [], []>} : vector<64x32xbf16>, vector<32x32xbf16>, vector<64x32xf32> -> vector<64x32xf32>
    %c0_36 = arith.constant 0 : index
    %c0_37 = arith.constant 0 : index
    %54 = vector.load %arg7[%c0_36, %c0_37] : memref<1x32xf32, #tpu.memory_space<vmem>>, vector<1x32xf32>
    %55 = vector.broadcast %54 : vector<1x32xf32> to vector<64x32xf32>
    %56 = arith.addf %53, %55 : vector<64x32xf32>
    %c0_38 = arith.constant 0 : index
    %c0_39 = arith.constant 0 : index
    %57 = vector.load %arg16[%c0_38, %c0_39] : memref<64x32xf32, #tpu.memory_space<vmem>>, vector<64x32xf32>
    %58 = arith.subf %56, %57 : vector<64x32xf32>
    %cst_40 = arith.constant 5.000000e-01 : f32
    %59 = vector.broadcast %cst_40 : f32 to vector<64x32xf32>
    %60 = arith.mulf %58, %59 : vector<64x32xf32>
    %61 = arith.addf %57, %60 : vector<64x32xf32>
    %cst_41 = arith.constant 1.000000e+00 : f32
    %62 = vector.broadcast %cst_41 : f32 to vector<64x32xf32>
    %63 = arith.cmpf oge, %61, %62 : vector<64x32xf32>
    %cst_42 = arith.constant 0.000000e+00 : f32
    %64 = vector.broadcast %cst_42 : f32 to vector<64x32xf32>
    %65 = arith.select %63, %64, %61 : vector<64x32xi1>, vector<64x32xf32>
    %c0_43 = arith.constant 0 : index
    %c0_44 = arith.constant 0 : index
    %66 = vector.load %arg16[%c0_43, %c0_44] : memref<64x32xf32, #tpu.memory_space<vmem>>, vector<64x32xf32>
    tpu.vector_store %arg16[%c0_43, %c0_44], %65 {strides = array<i32>} : memref<64x32xf32, #tpu.memory_space<vmem>>, vector<64x32xf32>,
    %67 = arith.extui %63 : vector<64x32xi1> to vector<64x32xi32>
    %68 = arith.sitofp %67 : vector<64x32xi32> to vector<64x32xf32>
    %c0_45 = arith.constant 0 : index
    %c0_46 = arith.constant 0 : index
    %c0_47 = arith.constant 0 : index
    %69 = vector.load %arg2[%c0_45, %c0_46, %c0_47] : memref<1x64x32xf32, #tpu.memory_space<vmem>>, vector<1x64x32xf32>
    %70 = vector.shape_cast %69 : vector<1x64x32xf32> to vector<64x32xf32>
    %71 = arith.addf %70, %68 : vector<64x32xf32>
    %72 = arith.truncf %71 : vector<64x32xf32> to vector<64x32xbf16>
    %c0_48 = arith.constant 0 : index
    %c0_49 = arith.constant 0 : index
    %73 = vector.load %arg8[%c0_48, %c0_49] : memref<32x128xbf16, #tpu.memory_space<vmem>>, vector<32x128xbf16>
    %cst_50 = arith.constant dense<0.000000e+00> : vector<64x128xf32>
    %74 = tpu.matmul %72, %73, %cst_50 {dimension_numbers = #tpu.dot_dimension_numbers<[1], [0], [0], [1], [0, 0, 1, 1], [], []>} : vector<64x32xbf16>, vector<32x128xbf16>, vector<64x128xf32> -> vector<64x128xf32>
    %c0_51 = arith.constant 0 : index
    %c0_52 = arith.constant 0 : index
    %75 = vector.load %arg9[%c0_51, %c0_52] : memref<1x128xf32, #tpu.memory_space<vmem>>, vector<1x128xf32>
    %76 = vector.broadcast %75 : vector<1x128xf32> to vector<64x128xf32>
    %77 = arith.addf %74, %76 : vector<64x128xf32>
    %c0_53 = arith.constant 0 : index
    %c0_54 = arith.constant 0 : index
    %78 = vector.load %arg17[%c0_53, %c0_54] : memref<64x128xf32, #tpu.memory_space<vmem>>, vector<64x128xf32>
    %79 = arith.subf %77, %78 : vector<64x128xf32>
    %cst_55 = arith.constant 5.000000e-01 : f32
    %80 = vector.broadcast %cst_55 : f32 to vector<64x128xf32>
    %81 = arith.mulf %79, %80 : vector<64x128xf32>
    %82 = arith.addf %78, %81 : vector<64x128xf32>
    %cst_56 = arith.constant 1.000000e+00 : f32
    %83 = vector.broadcast %cst_56 : f32 to vector<64x128xf32>
    %84 = arith.cmpf oge, %82, %83 : vector<64x128xf32>
    %cst_57 = arith.constant 0.000000e+00 : f32
    %85 = vector.broadcast %cst_57 : f32 to vector<64x128xf32>
    %86 = arith.select %84, %85, %82 : vector<64x128xi1>, vector<64x128xf32>
    %c0_58 = arith.constant 0 : index
    %c0_59 = arith.constant 0 : index
    %87 = vector.load %arg17[%c0_58, %c0_59] : memref<64x128xf32, #tpu.memory_space<vmem>>, vector<64x128xf32>
    tpu.vector_store %arg17[%c0_58, %c0_59], %86 {strides = array<i32>} : memref<64x128xf32, #tpu.memory_space<vmem>>, vector<64x128xf32>,
    %88 = arith.extui %84 : vector<64x128xi1> to vector<64x128xi32>
    %89 = arith.sitofp %88 : vector<64x128xi32> to vector<64x128xf32>
    %90 = arith.truncf %89 : vector<64x128xf32> to vector<64x128xbf16>
    %c0_60 = arith.constant 0 : index
    %c0_61 = arith.constant 0 : index
    %91 = vector.load %arg10[%c0_60, %c0_61] : memref<128x32xbf16, #tpu.memory_space<vmem>>, vector<128x32xbf16>
    %cst_62 = arith.constant dense<0.000000e+00> : vector<64x32xf32>
    %92 = tpu.matmul %90, %91, %cst_62 {dimension_numbers = #tpu.dot_dimension_numbers<[1], [0], [0], [1], [0, 0, 1, 1], [], []>} : vector<64x128xbf16>, vector<128x32xbf16>, vector<64x32xf32> -> vector<64x32xf32>
    %c0_63 = arith.constant 0 : index
    %c0_64 = arith.constant 0 : index
    %93 = vector.load %arg11[%c0_63, %c0_64] : memref<1x32xf32, #tpu.memory_space<vmem>>, vector<1x32xf32>
    %94 = vector.broadcast %93 : vector<1x32xf32> to vector<64x32xf32>
    %95 = arith.addf %92, %94 : vector<64x32xf32>
    %c0_65 = arith.constant 0 : index
    %c0_66 = arith.constant 0 : index
    %96 = vector.load %arg18[%c0_65, %c0_66] : memref<64x32xf32, #tpu.memory_space<vmem>>, vector<64x32xf32>
    %97 = arith.subf %95, %96 : vector<64x32xf32>
    %cst_67 = arith.constant 5.000000e-01 : f32
    %98 = vector.broadcast %cst_67 : f32 to vector<64x32xf32>
    %99 = arith.mulf %97, %98 : vector<64x32xf32>
    %100 = arith.addf %96, %99 : vector<64x32xf32>
    %cst_68 = arith.constant 1.000000e+00 : f32
    %101 = vector.broadcast %cst_68 : f32 to vector<64x32xf32>
    %102 = arith.cmpf oge, %100, %101 : vector<64x32xf32>
    %cst_69 = arith.constant 0.000000e+00 : f32
    %103 = vector.broadcast %cst_69 : f32 to vector<64x32xf32>
    %104 = arith.select %102, %103, %100 : vector<64x32xi1>, vector<64x32xf32>
    %c0_70 = arith.constant 0 : index
    %c0_71 = arith.constant 0 : index
    %105 = vector.load %arg18[%c0_70, %c0_71] : memref<64x32xf32, #tpu.memory_space<vmem>>, vector<64x32xf32>
    tpu.vector_store %arg18[%c0_70, %c0_71], %104 {strides = array<i32>} : memref<64x32xf32, #tpu.memory_space<vmem>>, vector<64x32xf32>,
    %106 = arith.extui %102 : vector<64x32xi1> to vector<64x32xi32>
    %107 = arith.sitofp %106 : vector<64x32xi32> to vector<64x32xf32>
    %108 = arith.addf %71, %107 : vector<64x32xf32>
    %c0_72 = arith.constant 0 : index
    %c0_73 = arith.constant 0 : index
    %c0_74 = arith.constant 0 : index
    %109 = vector.load %arg12[%c0_72, %c0_73, %c0_74] : memref<1x64x32xf32, #tpu.memory_space<vmem>>, vector<1x64x32xf32>
    %110 = vector.shape_cast %109 : vector<1x64x32xf32> to vector<64x32xf32>
    %111 = vector.shape_cast %108 : vector<64x32xf32> to vector<1x64x32xf32>
    tpu.vector_store %arg12[%c0_72, %c0_73, %c0_74], %111 {strides = array<i32>} : memref<1x64x32xf32, #tpu.memory_space<vmem>>, vector<1x64x32xf32>,
    return
  }
  func.func @transform_0(%arg0: i32, %arg1: i32) -> (i32, i32, i32) {
    %c0_i32 = arith.constant 0 : i32
    %c0_i32_0 = arith.constant 0 : i32
    return %arg1, %arg0, %c0_i32 : i32, i32, i32
  }
  func.func @transform_1(%arg0: i32, %arg1: i32) -> (i32, i32) {
    %c0_i32 = arith.constant 0 : i32
    %c0_i32_0 = arith.constant 0 : i32
    %c0_i32_1 = arith.constant 0 : i32
    return %c0_i32, %c0_i32_0 : i32, i32
  }
  func.func @transform_2(%arg0: i32, %arg1: i32) -> (i32, i32) {
    %c0_i32 = arith.constant 0 : i32
    %c0_i32_0 = arith.constant 0 : i32
    %c0_i32_1 = arith.constant 0 : i32
    return %c0_i32, %c0_i32_0 : i32, i32
  }
  func.func @transform_3(%arg0: i32, %arg1: i32) -> (i32, i32) {
    %c0_i32 = arith.constant 0 : i32
    %c0_i32_0 = arith.constant 0 : i32
    %c0_i32_1 = arith.constant 0 : i32
    return %c0_i32, %c0_i32_0 : i32, i32
  }
  func.func @transform_4(%arg0: i32, %arg1: i32) -> (i32, i32) {
    %c0_i32 = arith.constant 0 : i32
    %c0_i32_0 = arith.constant 0 : i32
    %c0_i32_1 = arith.constant 0 : i32
    return %c0_i32, %c0_i32_0 : i32, i32
  }
  func.func @transform_5(%arg0: i32, %arg1: i32) -> (i32, i32) {
    %c0_i32 = arith.constant 0 : i32
    %c0_i32_0 = arith.constant 0 : i32
    %c0_i32_1 = arith.constant 0 : i32
    return %c0_i32, %c0_i32_0 : i32, i32
  }
  func.func @transform_6(%arg0: i32, %arg1: i32) -> (i32, i32) {
    %c0_i32 = arith.constant 0 : i32
    %c0_i32_0 = arith.constant 0 : i32
    %c0_i32_1 = arith.constant 0 : i32
    return %c0_i32, %c0_i32_0 : i32, i32
  }
  func.func @transform_7(%arg0: i32, %arg1: i32) -> (i32, i32) {
    %c0_i32 = arith.constant 0 : i32
    %c0_i32_0 = arith.constant 0 : i32
    %c0_i32_1 = arith.constant 0 : i32
    return %c0_i32, %c0_i32_0 : i32, i32
  }
  func.func @transform_8(%arg0: i32, %arg1: i32) -> (i32, i32) {
    %c0_i32 = arith.constant 0 : i32
    %c0_i32_0 = arith.constant 0 : i32
    %c0_i32_1 = arith.constant 0 : i32
    return %c0_i32, %c0_i32_0 : i32, i32
  }
  func.func @transform_9(%arg0: i32, %arg1: i32) -> (i32, i32) {
    %c0_i32 = arith.constant 0 : i32
    %c0_i32_0 = arith.constant 0 : i32
    %c0_i32_1 = arith.constant 0 : i32
    return %c0_i32, %c0_i32_0 : i32, i32
  }
  func.func @transform_10(%arg0: i32, %arg1: i32) -> (i32, i32, i32) {
    %c0_i32 = arith.constant 0 : i32
    %c0_i32_0 = arith.constant 0 : i32
    return %arg1, %arg0, %c0_i32 : i32, i32, i32
  }
  func.func @transform_11(%arg0: i32, %arg1: i32) -> (i32, i32, i32) {
    %c0_i32 = arith.constant 0 : i32
    %c0_i32_0 = arith.constant 0 : i32
    return %arg1, %arg0, %c0_i32 : i32, i32, i32
  }
}

</mosaic_0001>

<llo_original>
// kernel: block_forward.1
$region0: #{block_forward.1}
  #allocation0 [shape = 'u32[]', space=smem, size = 0x4, offset = 0x4, fixed_abs, tag = 'smem constant byte address 0x4 - core index']
  #allocation1 [shape = 'u32[144,128]{1,0:T(1,128)}', space=vmem, size = 0x12000, scoped, tag = 'internal scratch']
  #allocation2 [shape = 'f32[64,96]{1,0:T(8,128)}', space=vmem, size = 0x8000, scoped, tag = 'scratch operand']
  #allocation3 [shape = 'f32[64,32]{1,0:T(8,128)}', space=vmem, size = 0x8000, scoped, tag = 'scratch operand']
  #allocation4 [shape = 'f32[64,32]{1,0:T(8,128)}', space=vmem, size = 0x8000, scoped, tag = 'scratch operand']
  #allocation5 [shape = 'f32[64,128]{1,0:T(8,128)}', space=vmem, size = 0x8000, scoped, tag = 'scratch operand']
  #allocation6 [shape = 'f32[64,32]{1,0:T(8,128)}', space=vmem, size = 0x8000, scoped, tag = 'scratch operand']
  #allocation7 [shape = 'bf16[64,32]{1,0:T(8,128)(2,1)}', space=vmem, size = 0x4000, scoped, tag = 'scratch operand']
  %s0 = inlined_call_operand.hbm [shape: f32[4,128,32], index: 0, kind: input, shape index: {}]
  %s1 = inlined_call_operand.vmem [shape: f32[32,32], index: 1, kind: input, shape index: {}]
  %s2 = inlined_call_operand.vmem [shape: bf16[32,96], index: 2, kind: input, shape index: {}]
  %s3 = inlined_call_operand.vmem [shape: f32[1,96], index: 3, kind: input, shape index: {}]
  %s4 = inlined_call_operand.vmem [shape: bf16[32,32], index: 4, kind: input, shape index: {}]
  %s5 = inlined_call_operand.vmem [shape: f32[1,32], index: 5, kind: input, shape index: {}]
  %s6 = inlined_call_operand.vmem [shape: bf16[32,128], index: 6, kind: input, shape index: {}]
  %s7 = inlined_call_operand.vmem [shape: f32[1,128], index: 7, kind: input, shape index: {}]
  %s8 = inlined_call_operand.vmem [shape: bf16[128,32], index: 8, kind: input, shape index: {}]
  %s9 = inlined_call_operand.vmem [shape: f32[1,32], index: 9, kind: input, shape index: {}]
  %s10 = inlined_call_operand.hbm [shape: f32[4,128,32], index: 10, kind: output, shape index: {0}]
  %s11 = inlined_call_operand.vmem [shape: bf16[4,128,32], index: 11, kind: output, shape index: {1}]
  %12 = xla_tuple %s10, %s11
  %s13 = sld [smem:[#allocation0]]
  $region89: #{block_forward.1} parent=0
    _
  %s15 = ssub.s32 1, %s13
  %s16 = scalar_select 0, %s15, %s13
  $region1: #{block_forward.1} parent=0
    #allocation8 [shape = 'u8[65536]{0}', space=vmem, size = 0x10000, scoped, tag = 'input window, operand 0']
    #allocation9 [shape = 's32[2]{0}', space=sflag, size = 0x8, scoped, tag = 'scoped memory for block_forward.1']
    #allocation10 [shape = 's32[2]{0}', space=sflag, size = 0x8, scoped, tag = 'scoped memory for block_forward.1']
    #allocation11 [shape = 'u8[65536]{0}', space=vmem, size = 0x10000, scoped, tag = 'output window, operand 0']
    %17 = vsyncpa [#allocation9], 0
    %s18 = scalar_lea.sflag [#allocation9], 1
    %19 = vsyncpa %s18, 0
    %20 = vsyncpa [#allocation10], 0
    %s21 = scalar_lea.sflag [#allocation10], 1
    %22 = vsyncpa %s21, 0
    loop: start=0, step=1, limit=10
    $region2: #{block_forward.1} parent=1 // loop_pre_header
      _
    $region3: #{block_forward.1} parent=1 // loop_header
      %s24 = sphi 0, %s28
      %p25 = scmp.ge.s32.totalorder %s24, 10
      %s31 = sphi 0, %s43
      %s32 = sphi 0, %s39
      %s33 = sphi 0, %s31
      %s34 = sphi 0, %s32
      %s35 = sphi 0, %s33
      %s36 = sphi 0, %s34
      %s48 = sphi 0, %s50
      %s51 = sphi 0, %s48
      %s52 = sphi 0, %s51
      %s68 = sphi 0, %s52
      %s72 = sphi 0, %s72
      %s74 = sphi 0, %s72
      %s75 = sphi 0, %s74
      %s89 = sphi 0, %s75
      %s93 = sphi 0, %s93
      %s95 = sphi 0, %s93
      %s96 = sphi 0, %s95
      %s110 = sphi 0, %s96
      %s114 = sphi 0, %s114
      %s116 = sphi 0, %s114
      %s117 = sphi 0, %s116
      %s131 = sphi 0, %s117
      %s135 = sphi 0, %s135
      %s137 = sphi 0, %s135
      %s138 = sphi 0, %s137
      %s152 = sphi 0, %s138
      %s156 = sphi 0, %s156
      %s158 = sphi 0, %s156
      %s159 = sphi 0, %s158
      %s173 = sphi 0, %s159
      %s177 = sphi 0, %s177
      %s179 = sphi 0, %s177
      %s180 = sphi 0, %s179
      %s194 = sphi 0, %s180
      %s198 = sphi 0, %s198
      %s200 = sphi 0, %s198
      %s201 = sphi 0, %s200
      %s215 = sphi 0, %s201
      %s219 = sphi 0, %s219
      %s221 = sphi 0, %s219
      %s222 = sphi 0, %s221
      %s236 = sphi 0, %s222
      %s240 = sphi 0, %s240
      %s242 = sphi 0, %s240
      %s243 = sphi 0, %s242
      %s257 = sphi 0, %s243
      %s265 = sphi 0, %s267
      %s268 = sphi 0, %s265
      %s269 = sphi 0, %s268
      %s285 = sphi 0, %s269
      %s293 = sphi 0, %s295
      %s296 = sphi 0, %s293
      %s297 = sphi 0, %s296
      %s313 = sphi 0, %s297
    $region4: #{block_forward.1} parent=1 // loop_header_branch
      %27 = sbr.rel (%p25) target = $region8
    $region5: #{block_forward.1} parent=1 // loop_body
      %s29 = ssub.s32 %s24, 1
      %s30 = ssub.s32 %s24, 2
      %s37 = sadd.s32 1, %s32
      %p38 = scmp.ge.s32.totalorder %s37, 4
      %s39 = scalar_select %p38, 0, %s37
      %s40 = sadd.s32 1, %s31
      %s41 = scalar_select %p38, %s40, %s31
      %p42 = scmp.ge.s32.totalorder %s41, 2
      %s43 = scalar_select %p42, 0, %s41
      %s44 = ssub.s32 %s32, %s39
      %s45 = ssub.s32 %s31, %s43
      %s46 = sor.u32 %s44, %s45
      %p47 = scmp.eq.s32.totalorder %s46, 0
      %s49 = sadd.s32 %s48, 1
      %s50 = scalar_select %p47, %s48, %s49
      %p53 = pneg %p47
      %p54 = scmp.eq.s32.totalorder %s24, 7
      %p55 = por %p53, %p54
      %p56 = scmp.ne.s32.totalorder %s48, %s51
      %p57 = scmp.eq.s32.totalorder %s24, 0
      %p58 = por %p56, %p57
      %p59 = scmp.ne.s32.totalorder %s48, %s51
      %p60 = scmp.eq.s32.totalorder %s29, 7
      %p61 = por %p59, %p60
      %p62 = scmp.ne.s32.totalorder %s51, %s52
      %p63 = scmp.eq.s32.totalorder %s29, 0
      %p64 = por %p62, %p63
      %p65 = scmp.ne.s32.totalorder %s51, %s52
      %p66 = scmp.eq.s32.totalorder %s30, 7
      %p67 = por %p65, %p66
      %p69 = scmp.ne.s32.totalorder %s52, %s68
      %p70 = scmp.eq.s32.totalorder %s30, 0
      %p71 = por %p69, %p70
      %s73 = sadd.s32 %s72, 1
      %p76 = scmp.eq.s32.totalorder %s24, 7
      %p77 = scmp.ne.s32.totalorder %s72, %s74
      %p78 = scmp.eq.s32.totalorder %s24, 0
      %p79 = por %p77, %p78
      %p80 = scmp.ne.s32.totalorder %s72, %s74
      %p81 = scmp.eq.s32.totalorder %s29, 7
      %p82 = por %p80, %p81
      %p83 = scmp.ne.s32.totalorder %s74, %s75
      %p84 = scmp.eq.s32.totalorder %s29, 0
      %p85 = por %p83, %p84
      %p86 = scmp.ne.s32.totalorder %s74, %s75
      %p87 = scmp.eq.s32.totalorder %s30, 7
      %p88 = por %p86, %p87
      %p90 = scmp.ne.s32.totalorder %s75, %s89
      %p91 = scmp.eq.s32.totalorder %s30, 0
      %p92 = por %p90, %p91
      %s94 = sadd.s32 %s93, 1
      %p97 = scmp.eq.s32.totalorder %s24, 7
      %p98 = scmp.ne.s32.totalorder %s93, %s95
      %p99 = scmp.eq.s32.totalorder %s24, 0
      %p100 = por %p98, %p99
      %p101 = scmp.ne.s32.totalorder %s93, %s95
      %p102 = scmp.eq.s32.totalorder %s29, 7
      %p103 = por %p101, %p102
      %p104 = scmp.ne.s32.totalorder %s95, %s96
      %p105 = scmp.eq.s32.totalorder %s29, 0
      %p106 = por %p104, %p105
      %p107 = scmp.ne.s32.totalorder %s95, %s96
      %p108 = scmp.eq.s32.totalorder %s30, 7
      %p109 = por %p107, %p108
      %p111 = scmp.ne.s32.totalorder %s96, %s110
      %p112 = scmp.eq.s32.totalorder %s30, 0
      %p113 = por %p111, %p112
      %s115 = sadd.s32 %s114, 1
      %p118 = scmp.eq.s32.totalorder %s24, 7
      %p119 = scmp.ne.s32.totalorder %s114, %s116
      %p120 = scmp.eq.s32.totalorder %s24, 0
      %p121 = por %p119, %p120
      %p122 = scmp.ne.s32.totalorder %s114, %s116
      %p123 = scmp.eq.s32.totalorder %s29, 7
      %p124 = por %p122, %p123
      %p125 = scmp.ne.s32.totalorder %s116, %s117
      %p126 = scmp.eq.s32.totalorder %s29, 0
      %p127 = por %p125, %p126
      %p128 = scmp.ne.s32.totalorder %s116, %s117
      %p129 = scmp.eq.s32.totalorder %s30, 7
      %p130 = por %p128, %p129
      %p132 = scmp.ne.s32.totalorder %s117, %s131
      %p133 = scmp.eq.s32.totalorder %s30, 0
      %p134 = por %p132, %p133
      %s136 = sadd.s32 %s135, 1
      %p139 = scmp.eq.s32.totalorder %s24, 7
      %p140 = scmp.ne.s32.totalorder %s135, %s137
      %p141 = scmp.eq.s32.totalorder %s24, 0
      %p142 = por %p140, %p141
      %p143 = scmp.ne.s32.totalorder %s135, %s137
      %p144 = scmp.eq.s32.totalorder %s29, 7
      %p145 = por %p143, %p144
      %p146 = scmp.ne.s32.totalorder %s137, %s138
      %p147 = scmp.eq.s32.totalorder %s29, 0
      %p148 = por %p146, %p147
      %p149 = scmp.ne.s32.totalorder %s137, %s138
      %p150 = scmp.eq.s32.totalorder %s30, 7
      %p151 = por %p149, %p150
      %p153 = scmp.ne.s32.totalorder %s138, %s152
      %p154 = scmp.eq.s32.totalorder %s30, 0
      %p155 = por %p153, %p154
      %s157 = sadd.s32 %s156, 1
      %p160 = scmp.eq.s32.totalorder %s24, 7
      %p161 = scmp.ne.s32.totalorder %s156, %s158
      %p162 = scmp.eq.s32.totalorder %s24, 0
      %p163 = por %p161, %p162
      %p164 = scmp.ne.s32.totalorder %s156, %s158
      %p165 = scmp.eq.s32.totalorder %s29, 7
      %p166 = por %p164, %p165
      %p167 = scmp.ne.s32.totalorder %s158, %s159
      %p168 = scmp.eq.s32.totalorder %s29, 0
      %p169 = por %p167, %p168
      %p170 = scmp.ne.s32.totalorder %s158, %s159
      %p171 = scmp.eq.s32.totalorder %s30, 7
      %p172 = por %p170, %p171
      %p174 = scmp.ne.s32.totalorder %s159, %s173
      %p175 = scmp.eq.s32.totalorder %s30, 0
      %p176 = por %p174, %p175
      %s178 = sadd.s32 %s177, 1
      %p181 = scmp.eq.s32.totalorder %s24, 7
      %p182 = scmp.ne.s32.totalorder %s177, %s179
      %p183 = scmp.eq.s32.totalorder %s24, 0
      %p184 = por %p182, %p183
      %p185 = scmp.ne.s32.totalorder %s177, %s179
      %p186 = scmp.eq.s32.totalorder %s29, 7
      %p187 = por %p185, %p186
      %p188 = scmp.ne.s32.totalorder %s179, %s180
      %p189 = scmp.eq.s32.totalorder %s29, 0
      %p190 = por %p188, %p189
      %p191 = scmp.ne.s32.totalorder %s179, %s180
      %p192 = scmp.eq.s32.totalorder %s30, 7
      %p193 = por %p191, %p192
      %p195 = scmp.ne.s32.totalorder %s180, %s194
      %p196 = scmp.eq.s32.totalorder %s30, 0
      %p197 = por %p195, %p196
      %s199 = sadd.s32 %s198, 1
      %p202 = scmp.eq.s32.totalorder %s24, 7
      %p203 = scmp.ne.s32.totalorder %s198, %s200
      %p204 = scmp.eq.s32.totalorder %s24, 0
      %p205 = por %p203, %p204
      %p206 = scmp.ne.s32.totalorder %s198, %s200
      %p207 = scmp.eq.s32.totalorder %s29, 7
      %p208 = por %p206, %p207
      %p209 = scmp.ne.s32.totalorder %s200, %s201
      %p210 = scmp.eq.s32.totalorder %s29, 0
      %p211 = por %p209, %p210
      %p212 = scmp.ne.s32.totalorder %s200, %s201
      %p213 = scmp.eq.s32.totalorder %s30, 7
      %p214 = por %p212, %p213
      %p216 = scmp.ne.s32.totalorder %s201, %s215
      %p217 = scmp.eq.s32.totalorder %s30, 0
      %p218 = por %p216, %p217
      %s220 = sadd.s32 %s219, 1
      %p223 = scmp.eq.s32.totalorder %s24, 7
      %p224 = scmp.ne.s32.totalorder %s219, %s221
      %p225 = scmp.eq.s32.totalorder %s24, 0
      %p226 = por %p224, %p225
      %p227 = scmp.ne.s32.totalorder %s219, %s221
      %p228 = scmp.eq.s32.totalorder %s29, 7
      %p229 = por %p227, %p228
      %p230 = scmp.ne.s32.totalorder %s221, %s222
      %p231 = scmp.eq.s32.totalorder %s29, 0
      %p232 = por %p230, %p231
      %p233 = scmp.ne.s32.totalorder %s221, %s222
      %p234 = scmp.eq.s32.totalorder %s30, 7
      %p235 = por %p233, %p234
      %p237 = scmp.ne.s32.totalorder %s222, %s236
      %p238 = scmp.eq.s32.totalorder %s30, 0
      %p239 = por %p237, %p238
      %s241 = sadd.s32 %s240, 1
      %p244 = scmp.eq.s32.totalorder %s24, 7
      %p245 = scmp.ne.s32.totalorder %s240, %s242
      %p246 = scmp.eq.s32.totalorder %s24, 0
      %p247 = por %p245, %p246
      %p248 = scmp.ne.s32.totalorder %s240, %s242
      %p249 = scmp.eq.s32.totalorder %s29, 7
      %p250 = por %p248, %p249
      %p251 = scmp.ne.s32.totalorder %s242, %s243
      %p252 = scmp.eq.s32.totalorder %s29, 0
      %p253 = por %p251, %p252
      %p254 = scmp.ne.s32.totalorder %s242, %s243
      %p255 = scmp.eq.s32.totalorder %s30, 7
      %p256 = por %p254, %p255
      %p258 = scmp.ne.s32.totalorder %s243, %s257
      %p259 = scmp.eq.s32.totalorder %s30, 0
      %p260 = por %p258, %p259
      %s261 = ssub.s32 %s32, %s39
      %s262 = ssub.s32 %s31, %s43
      %s263 = sor.u32 %s261, %s262
      %p264 = scmp.eq.s32.totalorder %s263, 0
      %s266 = sadd.s32 %s265, 1
      %s267 = scalar_select %p264, %s265, %s266
      %p270 = pneg %p264
      %p271 = scmp.eq.s32.totalorder %s24, 7
      %p272 = por %p270, %p271
      %p273 = scmp.ne.s32.totalorder %s265, %s268
      %p274 = scmp.eq.s32.totalorder %s24, 0
      %p275 = por %p273, %p274
      %p276 = scmp.ne.s32.totalorder %s265, %s268
      %p277 = scmp.eq.s32.totalorder %s29, 7
      %p278 = por %p276, %p277
      %p279 = scmp.ne.s32.totalorder %s268, %s269
      %p280 = scmp.eq.s32.totalorder %s29, 0
      %p281 = por %p279, %p280
      %p282 = scmp.ne.s32.totalorder %s268, %s269
      %p283 = scmp.eq.s32.totalorder %s30, 7
      %p284 = por %p282, %p283
      %p286 = scmp.ne.s32.totalorder %s269, %s285
      %p287 = scmp.eq.s32.totalorder %s30, 0
      %p288 = por %p286, %p287
      %s289 = ssub.s32 %s32, %s39
      %s290 = ssub.s32 %s31, %s43
      %s291 = sor.u32 %s289, %s290
      %p292 = scmp.eq.s32.totalorder %s291, 0
      %s294 = sadd.s32 %s293, 1
      %s295 = scalar_select %p292, %s293, %s294
      %p298 = pneg %p292
      %p299 = scmp.eq.s32.totalorder %s24, 7
      %p300 = por %p298, %p299
      %p301 = scmp.ne.s32.totalorder %s293, %s296
      %p302 = scmp.eq.s32.totalorder %s24, 0
      %p303 = por %p301, %p302
      %p304 = scmp.ne.s32.totalorder %s293, %s296
      %p305 = scmp.eq.s32.totalorder %s29, 7
      %p306 = por %p304, %p305
      %p307 = scmp.ne.s32.totalorder %s296, %s297
      %p308 = scmp.eq.s32.totalorder %s29, 0
      %p309 = por %p307, %p308
      %p310 = scmp.ne.s32.totalorder %s296, %s297
      %p311 = scmp.eq.s32.totalorder %s30, 7
      %p312 = por %p310, %p311
      %p314 = scmp.ne.s32.totalorder %s297, %s313
      %p315 = scmp.eq.s32.totalorder %s30, 0
      %p316 = por %p314, %p315
      %p317 = scmp.le.s32.totalorder 1, %s24
      %p318 = scmp.lt.s32.totalorder %s24, 9
      %p319 = pnand %p317, %p318
      %p320 = pneg %p319
      // Predicated region
      $region9: #{block_forward.1} parent=5 // pred_check
        _
      $region10: #{block_forward.1} parent=5 // pred_check_branch
        %322 = sbr.rel (%p319) target = $region12
      $region11: #{block_forward.1} parent=5 // pred_region
        %s323 = ssub.s32 %s24, 1
        // Predicated region
        $region13: #{block_forward.1} parent=11 // pred_check
          %p324 = pneg %p85
        $region14: #{block_forward.1} parent=11 // pred_check_branch
          %326 = sbr.rel (%p324) target = $region16
        $region15: #{block_forward.1} parent=11 // pred_region
          _
        $region16: #{block_forward.1} parent=11 // pred_fallthru
          _
        // Predicated region
        $region17: #{block_forward.1} parent=11 // pred_check
          %p327 = pneg %p106
        $region18: #{block_forward.1} parent=11 // pred_check_branch
          %329 = sbr.rel (%p327) target = $region20
        $region19: #{block_forward.1} parent=11 // pred_region
          _
        $region20: #{block_forward.1} parent=11 // pred_fallthru
          _
        // Predicated region
        $region21: #{block_forward.1} parent=11 // pred_check
          %p330 = pneg %p127
        $region22: #{block_forward.1} parent=11 // pred_check_branch
          %332 = sbr.rel (%p330) target = $region24
        $region23: #{block_forward.1} parent=11 // pred_region
          _
        $region24: #{block_forward.1} parent=11 // pred_fallthru
          _
        // Predicated region
        $region25: #{block_forward.1} parent=11 // pred_check
          %p333 = pneg %p148
        $region26: #{block_forward.1} parent=11 // pred_check_branch
          %335 = sbr.rel (%p333) target = $region28
        $region27: #{block_forward.1} parent=11 // pred_region
          _
        $region28: #{block_forward.1} parent=11 // pred_fallthru
          _
        // Predicated region
        $region29: #{block_forward.1} parent=11 // pred_check
          %p336 = pneg %p169
        $region30: #{block_forward.1} parent=11 // pred_check_branch
          %338 = sbr.rel (%p336) target = $region32
        $region31: #{block_forward.1} parent=11 // pred_region
          _
        $region32: #{block_forward.1} parent=11 // pred_fallthru
          _
        // Predicated region
        $region33: #{block_forward.1} parent=11 // pred_check
          %p339 = pneg %p190
        $region34: #{block_forward.1} parent=11 // pred_check_branch
          %341 = sbr.rel (%p339) target = $region36
        $region35: #{block_forward.1} parent=11 // pred_region
          _
        $region36: #{block_forward.1} parent=11 // pred_fallthru
          _
        // Predicated region
        $region37: #{block_forward.1} parent=11 // pred_check
          %p342 = pneg %p211
        $region38: #{block_forward.1} parent=11 // pred_check_branch
          %344 = sbr.rel (%p342) target = $region40
        $region39: #{block_forward.1} parent=11 // pred_region
          _
        $region40: #{block_forward.1} parent=11 // pred_fallthru
          _
        // Predicated region
        $region41: #{block_forward.1} parent=11 // pred_check
          %p345 = pneg %p232
        $region42: #{block_forward.1} parent=11 // pred_check_branch
          %347 = sbr.rel (%p345) target = $region44
        $region43: #{block_forward.1} parent=11 // pred_region
          _
        $region44: #{block_forward.1} parent=11 // pred_fallthru
          _
        // Predicated region
        $region45: #{block_forward.1} parent=11 // pred_check
          %p348 = pneg %p253
        $region46: #{block_forward.1} parent=11 // pred_check_branch
          %350 = sbr.rel (%p348) target = $region48
        $region47: #{block_forward.1} parent=11 // pred_region
          _
        $region48: #{block_forward.1} parent=11 // pred_fallthru
          _
      $region12: #{block_forward.1} parent=5 // pred_fallthru
        _
      %p351 = scmp.lt.s32.totalorder %s24, 8
      // Predicated region
      $region49: #{block_forward.1} parent=5 // pred_check
        %p352 = pneg %p351
      $region50: #{block_forward.1} parent=5 // pred_check_branch
        %354 = sbr.rel (%p352) target = $region52
      $region51: #{block_forward.1} parent=5 // pred_region
        // Predicated region
        $region53: #{block_forward.1} parent=51 // pred_check
          %p355 = pneg %p58
        $region54: #{block_forward.1} parent=51 // pred_check_branch
          %357 = sbr.rel (%p355) target = $region56
        $region55: #{block_forward.1} parent=51 // pred_region
          %s358 = sand.u32 %s48, 1
          %s359 = scalar_lea.sflag [#allocation9], %s358
          %s360 = sand.u32 %s48, 1
          %s361 = smul.addr %s360, 64
          %s362 = scalar_lea.vmem [#allocation8], %s361
          %s363 = smul.u32 8, %s31
          %s365 = ssub.s32 1024, 1024
          %366 = vsyncadd %s359, %s365
          %s367 = smul.addr %s32, 16
          %s368 = sadd.s32 %s363, %s367
          %s369 = smul.addr %s368, 128
          %s370 = scalar_lea.hbm %s0, %s369
          %s371 = sshll.u32 %s362, 4
          %s372 = int_to_ptr.vmem [resolvable:$true] %s371
          %377 = dma.hbm_to_vmem [thread:$0]  %s370, 1024, %s372, %s359, 128, 128, 8
        $region56: #{block_forward.1} parent=51 // pred_fallthru
          _
      $region52: #{block_forward.1} parent=5 // pred_fallthru
        _
      %p378 = scmp.le.s32.totalorder 1, %s24
      %p379 = scmp.lt.s32.totalorder %s24, 9
      %p380 = pnand %p378, %p379
      %p381 = pneg %p380
      // Predicated region
      $region57: #{block_forward.1} parent=5 // pred_check
        _
      $region58: #{block_forward.1} parent=5 // pred_check_branch
        %383 = sbr.rel (%p380) target = $region60
      $region59: #{block_forward.1} parent=5 // pred_region
        %s384 = ssub.s32 %s24, 1
        %s385 = sand.u32 %s51, 1
        %s386 = scalar_lea.sflag [#allocation9], %s385
        %s387 = sand.u32 %s51, 1
        %s388 = smul.addr %s387, 64
        %s389 = scalar_lea.vmem [#allocation8], %s388
        // Predicated region
        $region61: #{block_forward.1} parent=59 // pred_check
          %p390 = pneg %p64
        $region62: #{block_forward.1} parent=59 // pred_check_branch
          %392 = sbr.rel (%p390) target = $region64
        $region63: #{block_forward.1} parent=59 // pred_region
          %393 = dma.done %s386, 1024
        $region64: #{block_forward.1} parent=59 // pred_fallthru
          _
        %s394 = sand.u32 %s51, 1
        %s395 = scalar_lea.sflag [#allocation9], %s394
        %s396 = sand.u32 %s51, 1
        %s397 = smul.addr %s396, 64
        %s398 = scalar_lea.vmem [#allocation8], %s397
        %p399 = pneg %p64
        %p400 = pneg %p61
        %p401 = pneg %p85
        %p402 = pneg %p82
        %p403 = pneg %p106
        %p404 = pneg %p103
        %p405 = pneg %p127
        %p406 = pneg %p124
        %p407 = pneg %p148
        %p408 = pneg %p145
        %p409 = pneg %p169
        %p410 = pneg %p166
        %p411 = pneg %p190
        %p412 = pneg %p187
        %p413 = pneg %p211
        %p414 = pneg %p208
        %p415 = pneg %p232
        %p416 = pneg %p229
        %p417 = pneg %p253
        %p418 = pneg %p250
        %p419 = pneg %p281
        %p420 = pneg %p278
        %s421 = sand.u32 %s268, 1
        %s422 = scalar_lea.sflag [#allocation10], %s421
        %s423 = sand.u32 %s268, 1
        %s424 = smul.addr %s423, 64
        %s425 = scalar_lea.vmem [#allocation11], %s424
        %p426 = pneg %p309
        %p427 = pneg %p306
        %s428 = smul.u32 8, %s33
        %p429 = scmp.lt.s32.totalorder %s34, 3
        %s430 = scalar_select %p429, %s34, 3
        %p431 = scmp.lt.s32.totalorder %s428, 15
        %s432 = scalar_select %p431, %s428, 15
        %s433 = smul.addr %s430, 16
        %s434 = sadd.s32 %s432, %s433
        %s435 = smul.addr %s434, 4
        %s436 = scalar_lea.vmem %s11, %s435
        %s437 = smul.u32 8, %s33
        %s438 = smul.u32 8, %s33
        %s439 = smul.u32 8, %s33
        %p440 = scmp.lt.s32.totalorder %s34, 3
        %s441 = scalar_select %p440, %s34, 3
        %p442 = scmp.lt.s32.totalorder %s439, 15
        %s443 = scalar_select %p442, %s439, 15
        %s444 = smul.addr %s441, 16
        %s445 = sadd.s32 %s443, %s444
        %s446 = smul.addr %s445, 4
        %s447 = scalar_lea.vmem %s11, %s446
        %s448 = smul.u32 8, %s33
        %p450 = scmp.eq.s32.totalorder %s34, 0
        // Predicated region
        $region65: #{block_forward.1} parent=59 // pred_check
          %p451 = pneg %p450
        $region66: #{block_forward.1} parent=59 // pred_check_branch
          %453 = sbr.rel (%p451) target = $region68
        $region67: #{block_forward.1} parent=59 // pred_region
          %vm454 = vcmask 785408
          %455 = vst.msk [vmem:[#allocation2] sm:$0xff] %vm454, 0.0
          %456 = vst.msk [vmem:[#allocation2 + $0x8] sm:$0xff] %vm454, 0.0
          %457 = vst.msk [vmem:[#allocation2 + $0x10] sm:$0xff] %vm454, 0.0
          %458 = vst.msk [vmem:[#allocation2 + $0x18] sm:$0xff] %vm454, 0.0
          %459 = vst.msk [vmem:[#allocation2 + $0x20] sm:$0xff] %vm454, 0.0
          %460 = vst.msk [vmem:[#allocation2 + $0x28] sm:$0xff] %vm454, 0.0
          %461 = vst.msk [vmem:[#allocation2 + $0x30] sm:$0xff] %vm454, 0.0
          %462 = vst.msk [vmem:[#allocation2 + $0x38] sm:$0xff] %vm454, 0.0
          %vm463 = vcmask 261120
          %464 = vst.msk [vmem:[#allocation3] sm:$0xff] %vm463, 0.0
          %465 = vst.msk [vmem:[#allocation3 + $0x8] sm:$0xff] %vm463, 0.0
          %466 = vst.msk [vmem:[#allocation3 + $0x10] sm:$0xff] %vm463, 0.0
          %467 = vst.msk [vmem:[#allocation3 + $0x18] sm:$0xff] %vm463, 0.0
          %468 = vst.msk [vmem:[#allocation3 + $0x20] sm:$0xff] %vm463, 0.0
          %469 = vst.msk [vmem:[#allocation3 + $0x28] sm:$0xff] %vm463, 0.0
          %470 = vst.msk [vmem:[#allocation3 + $0x30] sm:$0xff] %vm463, 0.0
          %471 = vst.msk [vmem:[#allocation3 + $0x38] sm:$0xff] %vm463, 0.0
          %472 = vst.msk [vmem:[#allocation4] sm:$0xff] %vm463, 0.0
          %473 = vst.msk [vmem:[#allocation4 + $0x8] sm:$0xff] %vm463, 0.0
          %474 = vst.msk [vmem:[#allocation4 + $0x10] sm:$0xff] %vm463, 0.0
          %475 = vst.msk [vmem:[#allocation4 + $0x18] sm:$0xff] %vm463, 0.0
          %476 = vst.msk [vmem:[#allocation4 + $0x20] sm:$0xff] %vm463, 0.0
          %477 = vst.msk [vmem:[#allocation4 + $0x28] sm:$0xff] %vm463, 0.0
          %478 = vst.msk [vmem:[#allocation4 + $0x30] sm:$0xff] %vm463, 0.0
          %479 = vst.msk [vmem:[#allocation4 + $0x38] sm:$0xff] %vm463, 0.0
          %480 = vst [vmem:[#allocation5] sm:$0xff] 0.0
          %481 = vst [vmem:[#allocation5 + $0x8] sm:$0xff] 0.0
          %482 = vst [vmem:[#allocation5 + $0x10] sm:$0xff] 0.0
          %483 = vst [vmem:[#allocation5 + $0x18] sm:$0xff] 0.0
          %484 = vst [vmem:[#allocation5 + $0x20] sm:$0xff] 0.0
          %485 = vst [vmem:[#allocation5 + $0x28] sm:$0xff] 0.0
          %486 = vst [vmem:[#allocation5 + $0x30] sm:$0xff] 0.0
          %487 = vst [vmem:[#allocation5 + $0x38] sm:$0xff] 0.0
          %488 = vst.msk [vmem:[#allocation6] sm:$0xff] %vm463, 0.0
          %489 = vst.msk [vmem:[#allocation6 + $0x8] sm:$0xff] %vm463, 0.0
          %490 = vst.msk [vmem:[#allocation6 + $0x10] sm:$0xff] %vm463, 0.0
          %491 = vst.msk [vmem:[#allocation6 + $0x18] sm:$0xff] %vm463, 0.0
          %492 = vst.msk [vmem:[#allocation6 + $0x20] sm:$0xff] %vm463, 0.0
          %493 = vst.msk [vmem:[#allocation6 + $0x28] sm:$0xff] %vm463, 0.0
          %494 = vst.msk [vmem:[#allocation6 + $0x30] sm:$0xff] %vm463, 0.0
          %495 = vst.msk [vmem:[#allocation6 + $0x38] sm:$0xff] %vm463, 0.0
        $region68: #{block_forward.1} parent=59 // pred_fallthru
          _
        %v496 = vld [vmem:[%s389] sm:$0xff]
        %v497 = vld [vmem:[%s389 + $0x8] sm:$0xff]
        %v498 = vld [vmem:[%s389 + $0x10] sm:$0xff]
        %v499 = vld [vmem:[%s389 + $0x18] sm:$0xff]
        %v500 = vld [vmem:[%s389 + $0x20] sm:$0xff]
        %v501 = vld [vmem:[%s389 + $0x28] sm:$0xff]
        %v502 = vld [vmem:[%s389 + $0x30] sm:$0xff]
        %v503 = vld [vmem:[%s389 + $0x38] sm:$0xff]
        %v504 = vpack.c.bf16 %v497, %v496
        %v505 = vpack.c.bf16 %v499, %v498
        %v506 = vpack.c.bf16 %v501, %v500
        %v507 = vpack.c.bf16 %v503, %v502
        %v508 = vld [vmem:[%s2] sm:$0xf]
        %v509 = vld [vmem:[%s2 + $0x4] sm:$0xf]
        %v510 = vld [vmem:[%s2 + $0x8] sm:$0xf]
        %v511 = vld [vmem:[%s2 + $0xc] sm:$0xf]
        %v512 = vld [vmem:[%s3] sm:$0x1]
        %v514 = vlaneseq
        %v515 = vshrl.u32 %v514, 7
        %v516 = vsub.s32 0, %v515
        %v517 = vrot.slane %v512, %v516
        %v523 = vunpack.c.l.b16 %v508
        %v524 = vunpack.c.l.b16 %v509
        %v525 = vunpack.c.l.b16 %v510
        %v526 = vunpack.c.l.b16 %v511
        %v527 = vpack.c.b16 %v524, %v523
        %v528 = vpack.c.b16 %v526, %v525
        %vm531 = vcmask 261120
        %v533 = vsel %vm531, %v504, 0
        %v536 = vsel %vm531, %v505, 0
        %v539 = vsel %vm531, %v506, 0
        %v542 = vsel %vm531, %v507, 0
        %544 = vmatprep.subr.bf16.mxu0 0
        %545 = vmatpush1.bf16.msra.mxu0 0
        %546 = vmatprep.subr.bf16.mxu0 0
        %547 = vmatpush1.bf16.msra.mxu0 0
        %548 = vmatprep.subr.bf16.mxu0 0
        %549 = vmatpush1.bf16.msra.mxu0 0
        %550 = vmatprep.subr.bf16.mxu0 0
        %551 = vmatpush1.bf16.msra.mxu0 0
        %552 = vmatprep.subr.bf16.mxu0 0
        %553 = vmatpush1.bf16.msra.mxu0 0
        %554 = vmatprep.subr.bf16.mxu0 0
        %555 = vmatpush1.bf16.msra.mxu0 0
        %556 = vmatprep.subr.bf16.mxu0 0
        %557 = vmatpush1.bf16.msra.mxu0 %v528
        %558 = vmatprep.subr.bf16.mxu0 0
        %559 = vmatpush1.bf16.msra.mxu0 %v527
        %560 = vmatprep.subr.bf16.mxu0 0
        %561 = vmatpush2.bf16.msra.mxu0 0
        %562 = vmatprep.subr.bf16.mxu0 0
        %563 = vmatpush2.bf16.msra.mxu0 0
        %564 = vmatprep.subr.bf16.mxu0 0
        %565 = vmatpush2.bf16.msra.mxu0 0
        %566 = vmatprep.subr.bf16.mxu0 0
        %567 = vmatpush2.bf16.msra.mxu0 0
        %568 = vmatprep.subr.bf16.mxu0 0
        %569 = vmatpush2.bf16.msra.mxu0 0
        %570 = vmatprep.subr.bf16.mxu0 0
        %571 = vmatpush2.bf16.msra.mxu0 0
        %572 = vmatprep.subr.bf16.mxu0 0
        %573 = vmatpush2.bf16.msra.mxu0 0
        %574 = vmatprep.subr.bf16.mxu0 0
        %575 = vmatpush2.bf16.msra.mxu0 0
        %576 = vmatprep.mubr.bf16.mxu0 0
        %577 = vmatmul.mubr.bf16.gmra.mxu0 %v533
        %v578 = vpop.f32.mrf.mxu0
        %v579 = vadd.f32 %v517, %v578
        %v580 = vpop.f32.mrf.mxu0
        %v581 = vpop.f32.mrf.mxu0
        %v582 = vadd.f32 %v517, %v581
        %v583 = vpop.f32.mrf.mxu0
        %584 = vmatprep.mubr.bf16.mxu0 0
        %585 = vmatmul.mubr.bf16.gmra.mxu0 %v536
        %v586 = vpop.f32.mrf.mxu0
        %v587 = vadd.f32 %v517, %v586
        %v588 = vpop.f32.mrf.mxu0
        %v589 = vpop.f32.mrf.mxu0
        %v590 = vadd.f32 %v517, %v589
        %v591 = vpop.f32.mrf.mxu0
        %592 = vmatprep.mubr.bf16.mxu0 0
        %593 = vmatmul.mubr.bf16.gmra.mxu0 %v539
        %v594 = vpop.f32.mrf.mxu0
        %v595 = vadd.f32 %v517, %v594
        %v596 = vpop.f32.mrf.mxu0
        %v597 = vpop.f32.mrf.mxu0
        %v598 = vadd.f32 %v517, %v597
        %v599 = vpop.f32.mrf.mxu0
        %600 = vmatprep.mubr.bf16.mxu0 0
        %601 = vmatmul.mubr.bf16.gmra.mxu0 %v542
        %v602 = vpop.f32.mrf.mxu0
        %v603 = vadd.f32 %v517, %v602
        %v604 = vpop.f32.mrf.mxu0
        %v605 = vpop.f32.mrf.mxu0
        %v606 = vadd.f32 %v517, %v605
        %v607 = vpop.f32.mrf.mxu0
        %608 = vdwg.mxu0
        %v609 = vld [vmem:[#allocation2] sm:$0xff]
        %v610 = vld [vmem:[#allocation2 + $0x8] sm:$0xff]
        %v611 = vld [vmem:[#allocation2 + $0x10] sm:$0xff]
        %v612 = vld [vmem:[#allocation2 + $0x18] sm:$0xff]
        %v613 = vld [vmem:[#allocation2 + $0x20] sm:$0xff]
        %v614 = vld [vmem:[#allocation2 + $0x28] sm:$0xff]
        %v615 = vld [vmem:[#allocation2 + $0x30] sm:$0xff]
        %v616 = vld [vmem:[#allocation2 + $0x38] sm:$0xff]
        %v617 = vsub.f32 %v579, %v609
        %v618 = vsub.f32 %v582, %v610
        %v619 = vsub.f32 %v587, %v611
        %v620 = vsub.f32 %v590, %v612
        %v621 = vsub.f32 %v595, %v613
        %v622 = vsub.f32 %v598, %v614
        %v623 = vsub.f32 %v603, %v615
        %v624 = vsub.f32 %v606, %v616
        %v625 = vmul.f32 %v617, 0.5
        %v626 = vmul.f32 %v618, 0.5
        %v627 = vmul.f32 %v619, 0.5
        %v628 = vmul.f32 %v620, 0.5
        %v629 = vmul.f32 %v621, 0.5
        %v630 = vmul.f32 %v622, 0.5
        %v631 = vmul.f32 %v623, 0.5
        %v632 = vmul.f32 %v624, 0.5
        %v633 = vadd.f32 %v609, %v625
        %v634 = vadd.f32 %v610, %v626
        %v635 = vadd.f32 %v611, %v627
        %v636 = vadd.f32 %v612, %v628
        %v637 = vadd.f32 %v613, %v629
        %v638 = vadd.f32 %v614, %v630
        %v639 = vadd.f32 %v615, %v631
        %v640 = vadd.f32 %v616, %v632
        %vm641 = vcmp.ge.f32.partialorder %v633, 1.0
        %vm642 = vcmp.ge.f32.partialorder %v634, 1.0
        %vm643 = vcmp.ge.f32.partialorder %v635, 1.0
        %vm644 = vcmp.ge.f32.partialorder %v636, 1.0
        %vm645 = vcmp.ge.f32.partialorder %v637, 1.0
        %vm646 = vcmp.ge.f32.partialorder %v638, 1.0
        %vm647 = vcmp.ge.f32.partialorder %v639, 1.0
        %vm648 = vcmp.ge.f32.partialorder %v640, 1.0
        %v649 = vsel %vm641, 0.0, %v633
        %v650 = vsel %vm642, 0.0, %v634
        %v651 = vsel %vm643, 0.0, %v635
        %v652 = vsel %vm644, 0.0, %v636
        %v653 = vsel %vm645, 0.0, %v637
        %v654 = vsel %vm646, 0.0, %v638
        %v655 = vsel %vm647, 0.0, %v639
        %v656 = vsel %vm648, 0.0, %v640
        %vm657 = vcmask 785408
        %658 = vst.msk [vmem:[#allocation2] sm:$0xff] %vm657, %v649
        %659 = vst.msk [vmem:[#allocation2 + $0x8] sm:$0xff] %vm657, %v650
        %660 = vst.msk [vmem:[#allocation2 + $0x10] sm:$0xff] %vm657, %v651
        %661 = vst.msk [vmem:[#allocation2 + $0x18] sm:$0xff] %vm657, %v652
        %662 = vst.msk [vmem:[#allocation2 + $0x20] sm:$0xff] %vm657, %v653
        %663 = vst.msk [vmem:[#allocation2 + $0x28] sm:$0xff] %vm657, %v654
        %664 = vst.msk [vmem:[#allocation2 + $0x30] sm:$0xff] %vm657, %v655
        %665 = vst.msk [vmem:[#allocation2 + $0x38] sm:$0xff] %vm657, %v656
        %v666 = vsel %vm641, 1, 0
        %v667 = vsel %vm642, 1, 0
        %v668 = vsel %vm643, 1, 0
        %v669 = vsel %vm644, 1, 0
        %v670 = vsel %vm645, 1, 0
        %v671 = vsel %vm646, 1, 0
        %v672 = vsel %vm647, 1, 0
        %v673 = vsel %vm648, 1, 0
        %v674 = vcvt.s32.f32 %v666
        %v675 = vcvt.s32.f32 %v667
        %v676 = vcvt.s32.f32 %v668
        %v677 = vcvt.s32.f32 %v669
        %v678 = vcvt.s32.f32 %v670
        %v679 = vcvt.s32.f32 %v671
        %v680 = vcvt.s32.f32 %v672
        %v681 = vcvt.s32.f32 %v673
        %v682 = vpack.c.bf16 %v675, %v674
        %v683 = vpack.c.bf16 %v677, %v676
        %v684 = vpack.c.bf16 %v679, %v678
        %v685 = vpack.c.bf16 %v681, %v680
        %v690 = vunpack.c.l.b16 %v682
        %v691 = vunpack.c.h.b16 %v682
        %v692 = vunpack.c.l.b16 %v683
        %v693 = vunpack.c.h.b16 %v683
        %v694 = vunpack.c.l.b16 %v684
        %v695 = vunpack.c.h.b16 %v684
        %v696 = vunpack.c.l.b16 %v685
        %v697 = vunpack.c.h.b16 %v685
        %v698 = vpack.c.b16 %v690, %v690
        %v699 = vpack.c.b16 %v691, %v691
        %v700 = vpack.c.b16 %v692, %v692
        %v701 = vpack.c.b16 %v693, %v693
        %v702 = vpack.c.b16 %v694, %v694
        %v703 = vpack.c.b16 %v695, %v695
        %v704 = vpack.c.b16 %v696, %v696
        %v705 = vpack.c.b16 %v697, %v697
        %vm714 = vcmask 257024
        %715 = vst.msk [vmem:[#allocation7] sm:$0xf] %vm714, %v698
        %716 = vst.msk [vmem:[#allocation7 + $0x4] sm:$0xf] %vm714, %v699
        %717 = vst.msk [vmem:[#allocation7 + $0x8] sm:$0xf] %vm714, %v700
        %718 = vst.msk [vmem:[#allocation7 + $0xc] sm:$0xf] %vm714, %v701
        %719 = vst.msk [vmem:[#allocation7 + $0x10] sm:$0xf] %vm714, %v702
        %720 = vst.msk [vmem:[#allocation7 + $0x14] sm:$0xf] %vm714, %v703
        %721 = vst.msk [vmem:[#allocation7 + $0x18] sm:$0xf] %vm714, %v704
        %722 = vst.msk [vmem:[#allocation7 + $0x1c] sm:$0xf] %vm714, %v705
        %723 = vrot.lane.b32.xlu0 %v698, 64
        %v724 = vpop.permute.xlu0 %723
        %725 = vrot.lane.b32.xlu0 %v699, 64
        %v726 = vpop.permute.xlu0 %725
        %727 = vrot.lane.b32.xlu0 %v700, 64
        %v728 = vpop.permute.xlu0 %727
        %729 = vrot.lane.b32.xlu0 %v701, 64
        %v730 = vpop.permute.xlu0 %729
        %731 = vrot.lane.b32.xlu0 %v702, 64
        %v732 = vpop.permute.xlu0 %731
        %733 = vrot.lane.b32.xlu0 %v703, 64
        %v734 = vpop.permute.xlu0 %733
        %735 = vrot.lane.b32.xlu0 %v704, 64
        %v736 = vpop.permute.xlu0 %735
        %737 = vrot.lane.b32.xlu0 %v705, 64
        %v738 = vpop.permute.xlu0 %737
        %747 = vst.msk [vmem:[%s447] sm:$0xf] %vm714, %v724
        %748 = vst.msk [vmem:[%s447 + $0x4] sm:$0xf] %vm714, %v726
        %749 = vst.msk [vmem:[%s447 + $0x8] sm:$0xf] %vm714, %v728
        %750 = vst.msk [vmem:[%s447 + $0xc] sm:$0xf] %vm714, %v730
        %751 = vst.msk [vmem:[%s447 + $0x10] sm:$0xf] %vm714, %v732
        %752 = vst.msk [vmem:[%s447 + $0x14] sm:$0xf] %vm714, %v734
        %753 = vst.msk [vmem:[%s447 + $0x18] sm:$0xf] %vm714, %v736
        %754 = vst.msk [vmem:[%s447 + $0x1c] sm:$0xf] %vm714, %v738
        %755 = vrot.lane.b32.xlu0 %v682, 96
        %v756 = vpop.permute.xlu0 %755
        %757 = vrot.lane.b32.xlu0 %v683, 96
        %v758 = vpop.permute.xlu0 %757
        %759 = vrot.lane.b32.xlu0 %v684, 96
        %v760 = vpop.permute.xlu0 %759
        %761 = vrot.lane.b32.xlu0 %v685, 96
        %v762 = vpop.permute.xlu0 %761
        %767 = vxpose.xlu0.c.b16.start [1/8] %v756, 128
        %768 = vxpose.xlu0.c.b16.cont [2/8] %v758, 128
        %769 = vxpose.xlu0.c.b16.cont [3/8] %v760, 128
        %770 = vxpose.xlu0.c.b16.cont [4/8] %v762, 128
        %771 = vxpose.xlu0.c.b16.cont [5/8] 0, 128
        %772 = vxpose.xlu0.c.b16.cont [6/8] 0, 128
        %773 = vxpose.xlu0.c.b16.cont [7/8] 0, 128
        %774 = vxpose.xlu0.c.b16.end [8/8] 0, 128
        %v775 = vpop.trf.xlu0
        %v776 = vpop.trf.xlu0
        %v777 = vpop.trf.xlu0
        %v778 = vpop.trf.xlu0
        %v779 = vpop.trf.xlu0
        %v780 = vpop.trf.xlu0
        %v781 = vpop.trf.xlu0
        %v782 = vpop.trf.xlu0
        %783 = vrot.lane.b32.xlu0 %v682, 64
        %v784 = vpop.permute.xlu0 %783
        %785 = vrot.lane.b32.xlu0 %v683, 64
        %v786 = vpop.permute.xlu0 %785
        %787 = vrot.lane.b32.xlu0 %v684, 64
        %v788 = vpop.permute.xlu0 %787
        %789 = vrot.lane.b32.xlu0 %v685, 64
        %v790 = vpop.permute.xlu0 %789
        %vm795 = vcmask 523264
        %v797 = vsel %vm795, %v775, 0
        %v800 = vsel %vm795, %v776, 0
        %802 = vmatprep.subr.bf16.mxu0 0
        %803 = vmatpush1.bf16.msra.mxu0 0
        %804 = vmatprep.subr.bf16.mxu0 0
        %805 = vmatpush1.bf16.msra.mxu0 0
        %806 = vmatprep.subr.bf16.mxu0 0
        %807 = vmatpush1.bf16.msra.mxu0 0
        %808 = vmatprep.subr.bf16.mxu0 0
        %809 = vmatpush1.bf16.msra.mxu0 0
        %810 = vmatprep.subr.bf16.mxu0 0
        %811 = vmatpush1.bf16.msra.mxu0 %v790
        %812 = vmatprep.subr.bf16.mxu0 0
        %813 = vmatpush1.bf16.msra.mxu0 %v788
        %814 = vmatprep.subr.bf16.mxu0 0
        %815 = vmatpush1.bf16.msra.mxu0 %v786
        %816 = vmatprep.subr.bf16.mxu0 0
        %817 = vmatpush1.bf16.msra.mxu0 %v784
        %818 = vmatprep.subr.bf16.mxu0 0
        %819 = vmatpush2.bf16.msra.mxu0 0
        %820 = vmatprep.subr.bf16.mxu0 0
        %821 = vmatpush2.bf16.msra.mxu0 0
        %822 = vmatprep.subr.bf16.mxu0 0
        %823 = vmatpush2.bf16.msra.mxu0 0
        %824 = vmatprep.subr.bf16.mxu0 0
        %825 = vmatpush2.bf16.msra.mxu0 0
        %826 = vmatprep.subr.bf16.mxu0 0
        %827 = vmatpush2.bf16.msra.mxu0 0
        %828 = vmatprep.subr.bf16.mxu0 0
        %829 = vmatpush2.bf16.msra.mxu0 0
        %830 = vmatprep.subr.bf16.mxu0 0
        %831 = vmatpush2.bf16.msra.mxu0 0
        %832 = vmatprep.subr.bf16.mxu0 0
        %833 = vmatpush2.bf16.msra.mxu0 0
        %834 = vmatprep.mubr.bf16.mxu0 0
        %835 = vmatmul.mubr.bf16.gmra.mxu0 %v797
        %v836 = vpop.f32.mrf.mxu0
        %v837 = vadd.f32 0.0, %v836
        %v838 = vpop.f32.mrf.mxu0
        %v839 = vpop.f32.mrf.mxu0
        %v840 = vadd.f32 0.0, %v839
        %v841 = vpop.f32.mrf.mxu0
        %842 = vmatprep.mubr.bf16.mxu0 0
        %843 = vmatmul.mubr.bf16.gmra.mxu0 %v800
        %v844 = vpop.f32.mrf.mxu0
        %v845 = vadd.f32 0.0, %v844
        %v846 = vpop.f32.mrf.mxu0
        %v847 = vpop.f32.mrf.mxu0
        %v848 = vadd.f32 0.0, %v847
        %v849 = vpop.f32.mrf.mxu0
        %850 = vdwg.mxu0
        %v851 = vld [vmem:[%s1] sm:$0xff]
        %v852 = vld [vmem:[%s1 + $0x8] sm:$0xff]
        %v853 = vld [vmem:[%s1 + $0x10] sm:$0xff]
        %v854 = vld [vmem:[%s1 + $0x18] sm:$0xff]
        %v855 = vmul.f32 %v837, %v851
        %v856 = vmul.f32 %v840, %v852
        %v857 = vmul.f32 %v845, %v853
        %v858 = vmul.f32 %v848, %v854
        %v859 = vld [vmem:[#allocation7] sm:$0xf]
        %v860 = vld [vmem:[#allocation7 + $0x4] sm:$0xf]
        %v861 = vld [vmem:[#allocation7 + $0x8] sm:$0xf]
        %v862 = vld [vmem:[#allocation7 + $0xc] sm:$0xf]
        %v863 = vld [vmem:[#allocation7 + $0x10] sm:$0xf]
        %v864 = vld [vmem:[#allocation7 + $0x14] sm:$0xf]
        %v865 = vld [vmem:[#allocation7 + $0x18] sm:$0xf]
        %v866 = vld [vmem:[#allocation7 + $0x1c] sm:$0xf]
        %v867 = vunpack.c.l.bf16 %v859
        %v868 = vunpack.c.l.bf16 %v860
        %v869 = vunpack.c.l.bf16 %v861
        %v870 = vunpack.c.l.bf16 %v862
        %v871 = vunpack.c.l.bf16 %v863
        %v872 = vunpack.c.l.bf16 %v864
        %v873 = vunpack.c.l.bf16 %v865
        %v874 = vunpack.c.l.bf16 %v866
        %v876 = vsel %vm531, %v867, 0
        %v879 = vsel %vm531, %v868, 0
        %v882 = vsel %vm531, %v869, 0
        %v885 = vsel %vm531, %v870, 0
        %v888 = vsel %vm531, %v871, 0
        %v891 = vsel %vm531, %v872, 0
        %v894 = vsel %vm531, %v873, 0
        %v897 = vsel %vm531, %v874, 0
        %899 = vmatprep.subr.mxu0 0.0
        %900 = vmatpush1.msra.mxu0 0.0
        %901 = vmatprep.subr.mxu0 0.0
        %902 = vmatpush1.msra.mxu0 0.0
        %903 = vmatprep.subr.mxu0 0.0
        %904 = vmatpush1.msra.mxu0 0.0
        %905 = vmatprep.subr.mxu0 0.0
        %906 = vmatpush1.msra.mxu0 0.0
        %907 = vmatprep.subr.mxu0 0.0
        %908 = vmatpush1.msra.mxu0 0.0
        %909 = vmatprep.subr.mxu0 0.0
        %910 = vmatpush1.msra.mxu0 0.0
        %911 = vmatprep.subr.mxu0 0.0
        %912 = vmatpush1.msra.mxu0 0.0
        %913 = vmatprep.subr.mxu0 0.0
        %914 = vmatpush1.msra.mxu0 0.0
        %915 = vmatprep.subr.mxu0 0.0
        %916 = vmatpush1.msra.mxu0 0.0
        %917 = vmatprep.subr.mxu0 0.0
        %918 = vmatpush1.msra.mxu0 0.0
        %919 = vmatprep.subr.mxu0 0.0
        %920 = vmatpush1.msra.mxu0 0.0
        %921 = vmatprep.subr.mxu0 0.0
        %922 = vmatpush1.msra.mxu0 0.0
        %923 = vmatprep.subr.mxu0 0.0
        %924 = vmatpush1.msra.mxu0 %v858
        %925 = vmatprep.subr.mxu0 0.0
        %926 = vmatpush1.msra.mxu0 %v857
        %927 = vmatprep.subr.mxu0 0.0
        %928 = vmatpush1.msra.mxu0 %v856
        %929 = vmatprep.subr.mxu0 0.0
        %930 = vmatpush1.msra.mxu0 %v855
        %931 = vmatprep.subr.mxu0 0.0
        %932 = vmatpush2.msra.mxu0 0.0
        %933 = vmatprep.subr.mxu0 0.0
        %934 = vmatpush2.msra.mxu0 0.0
        %935 = vmatprep.subr.mxu0 0.0
        %936 = vmatpush2.msra.mxu0 0.0
        %937 = vmatprep.subr.mxu0 0.0
        %938 = vmatpush2.msra.mxu0 0.0
        %939 = vmatprep.subr.mxu0 0.0
        %940 = vmatpush2.msra.mxu0 0.0
        %941 = vmatprep.subr.mxu0 0.0
        %942 = vmatpush2.msra.mxu0 0.0
        %943 = vmatprep.subr.mxu0 0.0
        %944 = vmatpush2.msra.mxu0 0.0
        %945 = vmatprep.subr.mxu0 0.0
        %946 = vmatpush2.msra.mxu0 0.0
        %947 = vmatprep.subr.mxu0 0.0
        %948 = vmatpush2.msra.mxu0 0.0
        %949 = vmatprep.subr.mxu0 0.0
        %950 = vmatpush2.msra.mxu0 0.0
        %951 = vmatprep.subr.mxu0 0.0
        %952 = vmatpush2.msra.mxu0 0.0
        %953 = vmatprep.subr.mxu0 0.0
        %954 = vmatpush2.msra.mxu0 0.0
        %955 = vmatprep.subr.mxu0 0.0
        %956 = vmatpush2.msra.mxu0 0.0
        %957 = vmatprep.subr.mxu0 0.0
        %958 = vmatpush2.msra.mxu0 0.0
        %959 = vmatprep.subr.mxu0 0.0
        %960 = vmatpush2.msra.mxu0 0.0
        %961 = vmatprep.subr.mxu0 0.0
        %962 = vmatpush2.msra.mxu0 0.0
        %963 = vmatprep.mubr.f32.mxu0 0.0
        %964 = vmatmul.mubr.f32.gmra.mxu0 %v876
        %v965 = vpop.f32.mrf.mxu0
        %v966 = vadd.f32 0.0, %v965
        %v967 = vpop.f32.mrf.mxu0
        %968 = vmatprep.mubr.f32.mxu0 0.0
        %969 = vmatmul.mubr.f32.gmra.mxu0 %v879
        %v970 = vpop.f32.mrf.mxu0
        %v971 = vadd.f32 0.0, %v970
        %v972 = vpop.f32.mrf.mxu0
        %973 = vmatprep.mubr.f32.mxu0 0.0
        %974 = vmatmul.mubr.f32.gmra.mxu0 %v882
        %v975 = vpop.f32.mrf.mxu0
        %v976 = vadd.f32 0.0, %v975
        %v977 = vpop.f32.mrf.mxu0
        %978 = vmatprep.mubr.f32.mxu0 0.0
        %979 = vmatmul.mubr.f32.gmra.mxu0 %v885
        %v980 = vpop.f32.mrf.mxu0
        %v981 = vadd.f32 0.0, %v980
        %v982 = vpop.f32.mrf.mxu0
        %983 = vmatprep.mubr.f32.mxu0 0.0
        %984 = vmatmul.mubr.f32.gmra.mxu0 %v888
        %v985 = vpop.f32.mrf.mxu0
        %v986 = vadd.f32 0.0, %v985
        %v987 = vpop.f32.mrf.mxu0
        %988 = vmatprep.mubr.f32.mxu0 0.0
        %989 = vmatmul.mubr.f32.gmra.mxu0 %v891
        %v990 = vpop.f32.mrf.mxu0
        %v991 = vadd.f32 0.0, %v990
        %v992 = vpop.f32.mrf.mxu0
        %993 = vmatprep.mubr.f32.mxu0 0.0
        %994 = vmatmul.mubr.f32.gmra.mxu0 %v894
        %v995 = vpop.f32.mrf.mxu0
        %v996 = vadd.f32 0.0, %v995
        %v997 = vpop.f32.mrf.mxu0
        %998 = vmatprep.mubr.f32.mxu0 0.0
        %999 = vmatmul.mubr.f32.gmra.mxu0 %v897
        %v1000 = vpop.f32.mrf.mxu0
        %v1001 = vadd.f32 0.0, %v1000
        %v1002 = vpop.f32.mrf.mxu0
        %1003 = vdwg.mxu0
        %v1004 = vld [vmem:[#allocation3] sm:$0xff]
        %v1005 = vld [vmem:[#allocation3 + $0x8] sm:$0xff]
        %v1006 = vld [vmem:[#allocation3 + $0x10] sm:$0xff]
        %v1007 = vld [vmem:[#allocation3 + $0x18] sm:$0xff]
        %v1008 = vld [vmem:[#allocation3 + $0x20] sm:$0xff]
        %v1009 = vld [vmem:[#allocation3 + $0x28] sm:$0xff]
        %v1010 = vld [vmem:[#allocation3 + $0x30] sm:$0xff]
        %v1011 = vld [vmem:[#allocation3 + $0x38] sm:$0xff]
        %v1012 = vsub.f32 %v966, %v1004
        %v1013 = vsub.f32 %v971, %v1005
        %v1014 = vsub.f32 %v976, %v1006
        %v1015 = vsub.f32 %v981, %v1007
        %v1016 = vsub.f32 %v986, %v1008
        %v1017 = vsub.f32 %v991, %v1009
        %v1018 = vsub.f32 %v996, %v1010
        %v1019 = vsub.f32 %v1001, %v1011
        %v1020 = vmul.f32 %v1012, 0.5
        %v1021 = vmul.f32 %v1013, 0.5
        %v1022 = vmul.f32 %v1014, 0.5
        %v1023 = vmul.f32 %v1015, 0.5
        %v1024 = vmul.f32 %v1016, 0.5
        %v1025 = vmul.f32 %v1017, 0.5
        %v1026 = vmul.f32 %v1018, 0.5
        %v1027 = vmul.f32 %v1019, 0.5
        %v1028 = vadd.f32 %v1004, %v1020
        %v1029 = vadd.f32 %v1005, %v1021
        %v1030 = vadd.f32 %v1006, %v1022
        %v1031 = vadd.f32 %v1007, %v1023
        %v1032 = vadd.f32 %v1008, %v1024
        %v1033 = vadd.f32 %v1009, %v1025
        %v1034 = vadd.f32 %v1010, %v1026
        %v1035 = vadd.f32 %v1011, %v1027
        %vm1036 = vcmp.ge.f32.partialorder %v1028, 1.0
        %vm1037 = vcmp.ge.f32.partialorder %v1029, 1.0
        %vm1038 = vcmp.ge.f32.partialorder %v1030, 1.0
        %vm1039 = vcmp.ge.f32.partialorder %v1031, 1.0
        %vm1040 = vcmp.ge.f32.partialorder %v1032, 1.0
        %vm1041 = vcmp.ge.f32.partialorder %v1033, 1.0
        %vm1042 = vcmp.ge.f32.partialorder %v1034, 1.0
        %vm1043 = vcmp.ge.f32.partialorder %v1035, 1.0
        %v1044 = vsel %vm1036, 0.0, %v1028
        %v1045 = vsel %vm1037, 0.0, %v1029
        %v1046 = vsel %vm1038, 0.0, %v1030
        %v1047 = vsel %vm1039, 0.0, %v1031
        %v1048 = vsel %vm1040, 0.0, %v1032
        %v1049 = vsel %vm1041, 0.0, %v1033
        %v1050 = vsel %vm1042, 0.0, %v1034
        %v1051 = vsel %vm1043, 0.0, %v1035
        %1052 = vst.msk [vmem:[#allocation3] sm:$0xff] %vm531, %v1044
        %1053 = vst.msk [vmem:[#allocation3 + $0x8] sm:$0xff] %vm531, %v1045
        %1054 = vst.msk [vmem:[#allocation3 + $0x10] sm:$0xff] %vm531, %v1046
        %1055 = vst.msk [vmem:[#allocation3 + $0x18] sm:$0xff] %vm531, %v1047
        %1056 = vst.msk [vmem:[#allocation3 + $0x20] sm:$0xff] %vm531, %v1048
        %1057 = vst.msk [vmem:[#allocation3 + $0x28] sm:$0xff] %vm531, %v1049
        %1058 = vst.msk [vmem:[#allocation3 + $0x30] sm:$0xff] %vm531, %v1050
        %1059 = vst.msk [vmem:[#allocation3 + $0x38] sm:$0xff] %vm531, %v1051
        %v1060 = vsel %vm1036, 1, 0
        %v1061 = vsel %vm1037, 1, 0
        %v1062 = vsel %vm1038, 1, 0
        %v1063 = vsel %vm1039, 1, 0
        %v1064 = vsel %vm1040, 1, 0
        %v1065 = vsel %vm1041, 1, 0
        %v1066 = vsel %vm1042, 1, 0
        %v1067 = vsel %vm1043, 1, 0
        %v1068 = vcvt.s32.f32 %v1060
        %v1069 = vcvt.s32.f32 %v1061
        %v1070 = vcvt.s32.f32 %v1062
        %v1071 = vcvt.s32.f32 %v1063
        %v1072 = vcvt.s32.f32 %v1064
        %v1073 = vcvt.s32.f32 %v1065
        %v1074 = vcvt.s32.f32 %v1066
        %v1075 = vcvt.s32.f32 %v1067
        %v1076 = vpack.c.bf16 %v1069, %v1068
        %v1077 = vpack.c.bf16 %v1071, %v1070
        %v1078 = vpack.c.bf16 %v1073, %v1072
        %v1079 = vpack.c.bf16 %v1075, %v1074
        %v1080 = vld [vmem:[%s4] sm:$0xf]
        %v1081 = vld [vmem:[%s4 + $0x4] sm:$0xf]
        %v1082 = vld [vmem:[%s4 + $0x8] sm:$0xf]
        %v1083 = vld [vmem:[%s4 + $0xc] sm:$0xf]
        %v1084 = vld [vmem:[%s5] sm:$0x1]
        %v1086 = vlaneseq
        %v1087 = vshrl.u32 %v1086, 7
        %v1088 = vsub.s32 0, %v1087
        %v1089 = vrot.slane %v1084, %v1088
        %v1095 = vunpack.c.l.b16 %v1080
        %v1096 = vunpack.c.l.b16 %v1081
        %v1097 = vunpack.c.l.b16 %v1082
        %v1098 = vunpack.c.l.b16 %v1083
        %v1099 = vpack.c.b16 %v1096, %v1095
        %v1100 = vpack.c.b16 %v1098, %v1097
        %v1104 = vsel %vm531, %v1076, 0
        %v1107 = vsel %vm531, %v1077, 0
        %v1110 = vsel %vm531, %v1078, 0
        %v1113 = vsel %vm531, %v1079, 0
        %1115 = vmatprep.subr.bf16.mxu0 0
        %1116 = vmatpush1.bf16.msra.mxu0 0
        %1117 = vmatprep.subr.bf16.mxu0 0
        %1118 = vmatpush1.bf16.msra.mxu0 0
        %1119 = vmatprep.subr.bf16.mxu0 0
        %1120 = vmatpush1.bf16.msra.mxu0 0
        %1121 = vmatprep.subr.bf16.mxu0 0
        %1122 = vmatpush1.bf16.msra.mxu0 0
        %1123 = vmatprep.subr.bf16.mxu0 0
        %1124 = vmatpush1.bf16.msra.mxu0 0
        %1125 = vmatprep.subr.bf16.mxu0 0
        %1126 = vmatpush1.bf16.msra.mxu0 0
        %1127 = vmatprep.subr.bf16.mxu0 0
        %1128 = vmatpush1.bf16.msra.mxu0 %v1100
        %1129 = vmatprep.subr.bf16.mxu0 0
        %1130 = vmatpush1.bf16.msra.mxu0 %v1099
        %1131 = vmatprep.subr.bf16.mxu0 0
        %1132 = vmatpush2.bf16.msra.mxu0 0
        %1133 = vmatprep.subr.bf16.mxu0 0
        %1134 = vmatpush2.bf16.msra.mxu0 0
        %1135 = vmatprep.subr.bf16.mxu0 0
        %1136 = vmatpush2.bf16.msra.mxu0 0
        %1137 = vmatprep.subr.bf16.mxu0 0
        %1138 = vmatpush2.bf16.msra.mxu0 0
        %1139 = vmatprep.subr.bf16.mxu0 0
        %1140 = vmatpush2.bf16.msra.mxu0 0
        %1141 = vmatprep.subr.bf16.mxu0 0
        %1142 = vmatpush2.bf16.msra.mxu0 0
        %1143 = vmatprep.subr.bf16.mxu0 0
        %1144 = vmatpush2.bf16.msra.mxu0 0
        %1145 = vmatprep.subr.bf16.mxu0 0
        %1146 = vmatpush2.bf16.msra.mxu0 0
        %1147 = vmatprep.mubr.bf16.mxu0 0
        %1148 = vmatmul.mubr.bf16.gmra.mxu0 %v1104
        %v1149 = vpop.f32.mrf.mxu0
        %v1150 = vadd.f32 %v1089, %v1149
        %v1151 = vpop.f32.mrf.mxu0
        %v1152 = vpop.f32.mrf.mxu0
        %v1153 = vadd.f32 %v1089, %v1152
        %v1154 = vpop.f32.mrf.mxu0
        %1155 = vmatprep.mubr.bf16.mxu0 0
        %1156 = vmatmul.mubr.bf16.gmra.mxu0 %v1107
        %v1157 = vpop.f32.mrf.mxu0
        %v1158 = vadd.f32 %v1089, %v1157
        %v1159 = vpop.f32.mrf.mxu0
        %v1160 = vpop.f32.mrf.mxu0
        %v1161 = vadd.f32 %v1089, %v1160
        %v1162 = vpop.f32.mrf.mxu0
        %1163 = vmatprep.mubr.bf16.mxu0 0
        %1164 = vmatmul.mubr.bf16.gmra.mxu0 %v1110
        %v1165 = vpop.f32.mrf.mxu0
        %v1166 = vadd.f32 %v1089, %v1165
        %v1167 = vpop.f32.mrf.mxu0
        %v1168 = vpop.f32.mrf.mxu0
        %v1169 = vadd.f32 %v1089, %v1168
        %v1170 = vpop.f32.mrf.mxu0
        %1171 = vmatprep.mubr.bf16.mxu0 0
        %1172 = vmatmul.mubr.bf16.gmra.mxu0 %v1113
        %v1173 = vpop.f32.mrf.mxu0
        %v1174 = vadd.f32 %v1089, %v1173
        %v1175 = vpop.f32.mrf.mxu0
        %v1176 = vpop.f32.mrf.mxu0
        %v1177 = vadd.f32 %v1089, %v1176
        %v1178 = vpop.f32.mrf.mxu0
        %1179 = vdwg.mxu0
        %v1180 = vld [vmem:[#allocation4] sm:$0xff]
        %v1181 = vld [vmem:[#allocation4 + $0x8] sm:$0xff]
        %v1182 = vld [vmem:[#allocation4 + $0x10] sm:$0xff]
        %v1183 = vld [vmem:[#allocation4 + $0x18] sm:$0xff]
        %v1184 = vld [vmem:[#allocation4 + $0x20] sm:$0xff]
        %v1185 = vld [vmem:[#allocation4 + $0x28] sm:$0xff]
        %v1186 = vld [vmem:[#allocation4 + $0x30] sm:$0xff]
        %v1187 = vld [vmem:[#allocation4 + $0x38] sm:$0xff]
        %v1188 = vsub.f32 %v1150, %v1180
        %v1189 = vsub.f32 %v1153, %v1181
        %v1190 = vsub.f32 %v1158, %v1182
        %v1191 = vsub.f32 %v1161, %v1183
        %v1192 = vsub.f32 %v1166, %v1184
        %v1193 = vsub.f32 %v1169, %v1185
        %v1194 = vsub.f32 %v1174, %v1186
        %v1195 = vsub.f32 %v1177, %v1187
        %v1196 = vmul.f32 %v1188, 0.5
        %v1197 = vmul.f32 %v1189, 0.5
        %v1198 = vmul.f32 %v1190, 0.5
        %v1199 = vmul.f32 %v1191, 0.5
        %v1200 = vmul.f32 %v1192, 0.5
        %v1201 = vmul.f32 %v1193, 0.5
        %v1202 = vmul.f32 %v1194, 0.5
        %v1203 = vmul.f32 %v1195, 0.5
        %v1204 = vadd.f32 %v1180, %v1196
        %v1205 = vadd.f32 %v1181, %v1197
        %v1206 = vadd.f32 %v1182, %v1198
        %v1207 = vadd.f32 %v1183, %v1199
        %v1208 = vadd.f32 %v1184, %v1200
        %v1209 = vadd.f32 %v1185, %v1201
        %v1210 = vadd.f32 %v1186, %v1202
        %v1211 = vadd.f32 %v1187, %v1203
        %vm1212 = vcmp.ge.f32.partialorder %v1204, 1.0
        %vm1213 = vcmp.ge.f32.partialorder %v1205, 1.0
        %vm1214 = vcmp.ge.f32.partialorder %v1206, 1.0
        %vm1215 = vcmp.ge.f32.partialorder %v1207, 1.0
        %vm1216 = vcmp.ge.f32.partialorder %v1208, 1.0
        %vm1217 = vcmp.ge.f32.partialorder %v1209, 1.0
        %vm1218 = vcmp.ge.f32.partialorder %v1210, 1.0
        %vm1219 = vcmp.ge.f32.partialorder %v1211, 1.0
        %v1220 = vsel %vm1212, 0.0, %v1204
        %v1221 = vsel %vm1213, 0.0, %v1205
        %v1222 = vsel %vm1214, 0.0, %v1206
        %v1223 = vsel %vm1215, 0.0, %v1207
        %v1224 = vsel %vm1216, 0.0, %v1208
        %v1225 = vsel %vm1217, 0.0, %v1209
        %v1226 = vsel %vm1218, 0.0, %v1210
        %v1227 = vsel %vm1219, 0.0, %v1211
        %1228 = vst.msk [vmem:[#allocation4] sm:$0xff] %vm531, %v1220
        %1229 = vst.msk [vmem:[#allocation4 + $0x8] sm:$0xff] %vm531, %v1221
        %1230 = vst.msk [vmem:[#allocation4 + $0x10] sm:$0xff] %vm531, %v1222
        %1231 = vst.msk [vmem:[#allocation4 + $0x18] sm:$0xff] %vm531, %v1223
        %1232 = vst.msk [vmem:[#allocation4 + $0x20] sm:$0xff] %vm531, %v1224
        %1233 = vst.msk [vmem:[#allocation4 + $0x28] sm:$0xff] %vm531, %v1225
        %1234 = vst.msk [vmem:[#allocation4 + $0x30] sm:$0xff] %vm531, %v1226
        %1235 = vst.msk [vmem:[#allocation4 + $0x38] sm:$0xff] %vm531, %v1227
        %v1236 = vsel %vm1212, 1, 0
        %v1237 = vsel %vm1213, 1, 0
        %v1238 = vsel %vm1214, 1, 0
        %v1239 = vsel %vm1215, 1, 0
        %v1240 = vsel %vm1216, 1, 0
        %v1241 = vsel %vm1217, 1, 0
        %v1242 = vsel %vm1218, 1, 0
        %v1243 = vsel %vm1219, 1, 0
        %v1244 = vcvt.s32.f32 %v1236
        %v1245 = vcvt.s32.f32 %v1237
        %v1246 = vcvt.s32.f32 %v1238
        %v1247 = vcvt.s32.f32 %v1239
        %v1248 = vcvt.s32.f32 %v1240
        %v1249 = vcvt.s32.f32 %v1241
        %v1250 = vcvt.s32.f32 %v1242
        %v1251 = vcvt.s32.f32 %v1243
        %v1252 = vld [vmem:[%s389] sm:$0xff]
        %v1253 = vld [vmem:[%s389 + $0x8] sm:$0xff]
        %v1254 = vld [vmem:[%s389 + $0x10] sm:$0xff]
        %v1255 = vld [vmem:[%s389 + $0x18] sm:$0xff]
        %v1256 = vld [vmem:[%s389 + $0x20] sm:$0xff]
        %v1257 = vld [vmem:[%s389 + $0x28] sm:$0xff]
        %v1258 = vld [vmem:[%s389 + $0x30] sm:$0xff]
        %v1259 = vld [vmem:[%s389 + $0x38] sm:$0xff]
        %v1260 = vadd.f32 %v1252, %v1244
        %v1261 = vadd.f32 %v1253, %v1245
        %v1262 = vadd.f32 %v1254, %v1246
        %v1263 = vadd.f32 %v1255, %v1247
        %v1264 = vadd.f32 %v1256, %v1248
        %v1265 = vadd.f32 %v1257, %v1249
        %v1266 = vadd.f32 %v1258, %v1250
        %v1267 = vadd.f32 %v1259, %v1251
        %v1268 = vpack.c.bf16 %v1261, %v1260
        %v1269 = vpack.c.bf16 %v1263, %v1262
        %v1270 = vpack.c.bf16 %v1265, %v1264
        %v1271 = vpack.c.bf16 %v1267, %v1266
        %v1272 = vld [vmem:[%s6] sm:$0xf]
        %v1273 = vld [vmem:[%s6 + $0x4] sm:$0xf]
        %v1274 = vld [vmem:[%s6 + $0x8] sm:$0xf]
        %v1275 = vld [vmem:[%s6 + $0xc] sm:$0xf]
        %v1276 = vld [vmem:[%s7] sm:$0x1]
        %v1278 = vlaneseq
        %v1279 = vshrl.u32 %v1278, 7
        %v1280 = vsub.s32 0, %v1279
        %v1281 = vrot.slane %v1276, %v1280
        %v1287 = vunpack.c.l.b16 %v1272
        %v1288 = vunpack.c.l.b16 %v1273
        %v1289 = vunpack.c.l.b16 %v1274
        %v1290 = vunpack.c.l.b16 %v1275
        %v1291 = vpack.c.b16 %v1288, %v1287
        %v1292 = vpack.c.b16 %v1290, %v1289
        %v1296 = vsel %vm531, %v1268, 0
        %v1299 = vsel %vm531, %v1269, 0
        %v1302 = vsel %vm531, %v1270, 0
        %v1305 = vsel %vm531, %v1271, 0
        %1307 = vmatprep.subr.bf16.mxu0 0
        %1308 = vmatpush1.bf16.msra.mxu0 0
        %1309 = vmatprep.subr.bf16.mxu0 0
        %1310 = vmatpush1.bf16.msra.mxu0 0
        %1311 = vmatprep.subr.bf16.mxu0 0
        %1312 = vmatpush1.bf16.msra.mxu0 0
        %1313 = vmatprep.subr.bf16.mxu0 0
        %1314 = vmatpush1.bf16.msra.mxu0 0
        %1315 = vmatprep.subr.bf16.mxu0 0
        %1316 = vmatpush1.bf16.msra.mxu0 0
        %1317 = vmatprep.subr.bf16.mxu0 0
        %1318 = vmatpush1.bf16.msra.mxu0 0
        %1319 = vmatprep.subr.bf16.mxu0 0
        %1320 = vmatpush1.bf16.msra.mxu0 %v1292
        %1321 = vmatprep.subr.bf16.mxu0 0
        %1322 = vmatpush1.bf16.msra.mxu0 %v1291
        %1323 = vmatprep.subr.bf16.mxu0 0
        %1324 = vmatpush2.bf16.msra.mxu0 0
        %1325 = vmatprep.subr.bf16.mxu0 0
        %1326 = vmatpush2.bf16.msra.mxu0 0
        %1327 = vmatprep.subr.bf16.mxu0 0
        %1328 = vmatpush2.bf16.msra.mxu0 0
        %1329 = vmatprep.subr.bf16.mxu0 0
        %1330 = vmatpush2.bf16.msra.mxu0 0
        %1331 = vmatprep.subr.bf16.mxu0 0
        %1332 = vmatpush2.bf16.msra.mxu0 0
        %1333 = vmatprep.subr.bf16.mxu0 0
        %1334 = vmatpush2.bf16.msra.mxu0 0
        %1335 = vmatprep.subr.bf16.mxu0 0
        %1336 = vmatpush2.bf16.msra.mxu0 0
        %1337 = vmatprep.subr.bf16.mxu0 0
        %1338 = vmatpush2.bf16.msra.mxu0 0
        %1339 = vmatprep.mubr.bf16.mxu0 0
        %1340 = vmatmul.mubr.bf16.gmra.mxu0 %v1296
        %v1341 = vpop.f32.mrf.mxu0
        %v1342 = vadd.f32 %v1281, %v1341
        %v1343 = vpop.f32.mrf.mxu0
        %v1344 = vpop.f32.mrf.mxu0
        %v1345 = vadd.f32 %v1281, %v1344
        %v1346 = vpop.f32.mrf.mxu0
        %1347 = vmatprep.mubr.bf16.mxu0 0
        %1348 = vmatmul.mubr.bf16.gmra.mxu0 %v1299
        %v1349 = vpop.f32.mrf.mxu0
        %v1350 = vadd.f32 %v1281, %v1349
        %v1351 = vpop.f32.mrf.mxu0
        %v1352 = vpop.f32.mrf.mxu0
        %v1353 = vadd.f32 %v1281, %v1352
        %v1354 = vpop.f32.mrf.mxu0
        %1355 = vmatprep.mubr.bf16.mxu0 0
        %1356 = vmatmul.mubr.bf16.gmra.mxu0 %v1302
        %v1357 = vpop.f32.mrf.mxu0
        %v1358 = vadd.f32 %v1281, %v1357
        %v1359 = vpop.f32.mrf.mxu0
        %v1360 = vpop.f32.mrf.mxu0
        %v1361 = vadd.f32 %v1281, %v1360
        %v1362 = vpop.f32.mrf.mxu0
        %1363 = vmatprep.mubr.bf16.mxu0 0
        %1364 = vmatmul.mubr.bf16.gmra.mxu0 %v1305
        %v1365 = vpop.f32.mrf.mxu0
        %v1366 = vadd.f32 %v1281, %v1365
        %v1367 = vpop.f32.mrf.mxu0
        %v1368 = vpop.f32.mrf.mxu0
        %v1369 = vadd.f32 %v1281, %v1368
        %v1370 = vpop.f32.mrf.mxu0
        %1371 = vdwg.mxu0
        %v1372 = vld [vmem:[#allocation5] sm:$0xff]
        %v1373 = vld [vmem:[#allocation5 + $0x8] sm:$0xff]
        %v1374 = vld [vmem:[#allocation5 + $0x10] sm:$0xff]
        %v1375 = vld [vmem:[#allocation5 + $0x18] sm:$0xff]
        %v1376 = vld [vmem:[#allocation5 + $0x20] sm:$0xff]
        %v1377 = vld [vmem:[#allocation5 + $0x28] sm:$0xff]
        %v1378 = vld [vmem:[#allocation5 + $0x30] sm:$0xff]
        %v1379 = vld [vmem:[#allocation5 + $0x38] sm:$0xff]
        %v1380 = vsub.f32 %v1342, %v1372
        %v1381 = vsub.f32 %v1345, %v1373
        %v1382 = vsub.f32 %v1350, %v1374
        %v1383 = vsub.f32 %v1353, %v1375
        %v1384 = vsub.f32 %v1358, %v1376
        %v1385 = vsub.f32 %v1361, %v1377
        %v1386 = vsub.f32 %v1366, %v1378
        %v1387 = vsub.f32 %v1369, %v1379
        %v1388 = vmul.f32 %v1380, 0.5
        %v1389 = vmul.f32 %v1381, 0.5
        %v1390 = vmul.f32 %v1382, 0.5
        %v1391 = vmul.f32 %v1383, 0.5
        %v1392 = vmul.f32 %v1384, 0.5
        %v1393 = vmul.f32 %v1385, 0.5
        %v1394 = vmul.f32 %v1386, 0.5
        %v1395 = vmul.f32 %v1387, 0.5
        %v1396 = vadd.f32 %v1372, %v1388
        %v1397 = vadd.f32 %v1373, %v1389
        %v1398 = vadd.f32 %v1374, %v1390
        %v1399 = vadd.f32 %v1375, %v1391
        %v1400 = vadd.f32 %v1376, %v1392
        %v1401 = vadd.f32 %v1377, %v1393
        %v1402 = vadd.f32 %v1378, %v1394
        %v1403 = vadd.f32 %v1379, %v1395
        %vm1404 = vcmp.ge.f32.partialorder %v1396, 1.0
        %vm1405 = vcmp.ge.f32.partialorder %v1397, 1.0
        %vm1406 = vcmp.ge.f32.partialorder %v1398, 1.0
        %vm1407 = vcmp.ge.f32.partialorder %v1399, 1.0
        %vm1408 = vcmp.ge.f32.partialorder %v1400, 1.0
        %vm1409 = vcmp.ge.f32.partialorder %v1401, 1.0
        %vm1410 = vcmp.ge.f32.partialorder %v1402, 1.0
        %vm1411 = vcmp.ge.f32.partialorder %v1403, 1.0
        %v1412 = vsel %vm1404, 0.0, %v1396
        %v1413 = vsel %vm1405, 0.0, %v1397
        %v1414 = vsel %vm1406, 0.0, %v1398
        %v1415 = vsel %vm1407, 0.0, %v1399
        %v1416 = vsel %vm1408, 0.0, %v1400
        %v1417 = vsel %vm1409, 0.0, %v1401
        %v1418 = vsel %vm1410, 0.0, %v1402
        %v1419 = vsel %vm1411, 0.0, %v1403
        %1420 = vst [vmem:[#allocation5] sm:$0xff] %v1412
        %1421 = vst [vmem:[#allocation5 + $0x8] sm:$0xff] %v1413
        %1422 = vst [vmem:[#allocation5 + $0x10] sm:$0xff] %v1414
        %1423 = vst [vmem:[#allocation5 + $0x18] sm:$0xff] %v1415
        %1424 = vst [vmem:[#allocation5 + $0x20] sm:$0xff] %v1416
        %1425 = vst [vmem:[#allocation5 + $0x28] sm:$0xff] %v1417
        %1426 = vst [vmem:[#allocation5 + $0x30] sm:$0xff] %v1418
        %1427 = vst [vmem:[#allocation5 + $0x38] sm:$0xff] %v1419
        %v1428 = vsel %vm1404, 1, 0
        %v1429 = vsel %vm1405, 1, 0
        %v1430 = vsel %vm1406, 1, 0
        %v1431 = vsel %vm1407, 1, 0
        %v1432 = vsel %vm1408, 1, 0
        %v1433 = vsel %vm1409, 1, 0
        %v1434 = vsel %vm1410, 1, 0
        %v1435 = vsel %vm1411, 1, 0
        %v1436 = vcvt.s32.f32 %v1428
        %v1437 = vcvt.s32.f32 %v1429
        %v1438 = vcvt.s32.f32 %v1430
        %v1439 = vcvt.s32.f32 %v1431
        %v1440 = vcvt.s32.f32 %v1432
        %v1441 = vcvt.s32.f32 %v1433
        %v1442 = vcvt.s32.f32 %v1434
        %v1443 = vcvt.s32.f32 %v1435
        %v1444 = vpack.c.bf16 %v1437, %v1436
        %v1445 = vpack.c.bf16 %v1439, %v1438
        %v1446 = vpack.c.bf16 %v1441, %v1440
        %v1447 = vpack.c.bf16 %v1443, %v1442
        %v1448 = vld [vmem:[%s8] sm:$0xf]
        %v1449 = vld [vmem:[%s8 + $0x4] sm:$0xf]
        %v1450 = vld [vmem:[%s8 + $0x8] sm:$0xf]
        %v1451 = vld [vmem:[%s8 + $0xc] sm:$0xf]
        %v1452 = vld [vmem:[%s8 + $0x10] sm:$0xf]
        %v1453 = vld [vmem:[%s8 + $0x14] sm:$0xf]
        %v1454 = vld [vmem:[%s8 + $0x18] sm:$0xf]
        %v1455 = vld [vmem:[%s8 + $0x1c] sm:$0xf]
        %v1456 = vld [vmem:[%s8 + $0x20] sm:$0xf]
        %v1457 = vld [vmem:[%s8 + $0x24] sm:$0xf]
        %v1458 = vld [vmem:[%s8 + $0x28] sm:$0xf]
        %v1459 = vld [vmem:[%s8 + $0x2c] sm:$0xf]
        %v1460 = vld [vmem:[%s8 + $0x30] sm:$0xf]
        %v1461 = vld [vmem:[%s8 + $0x34] sm:$0xf]
        %v1462 = vld [vmem:[%s8 + $0x38] sm:$0xf]
        %v1463 = vld [vmem:[%s8 + $0x3c] sm:$0xf]
        %v1464 = vld [vmem:[%s9] sm:$0x1]
        %v1466 = vlaneseq
        %v1467 = vshrl.u32 %v1466, 7
        %v1468 = vsub.s32 0, %v1467
        %v1469 = vrot.slane %v1464, %v1468
        %v1487 = vunpack.c.l.b16 %v1448
        %v1488 = vunpack.c.l.b16 %v1449
        %v1489 = vunpack.c.l.b16 %v1450
        %v1490 = vunpack.c.l.b16 %v1451
        %v1491 = vunpack.c.l.b16 %v1452
        %v1492 = vunpack.c.l.b16 %v1453
        %v1493 = vunpack.c.l.b16 %v1454
        %v1494 = vunpack.c.l.b16 %v1455
        %v1495 = vunpack.c.l.b16 %v1456
        %v1496 = vunpack.c.l.b16 %v1457
        %v1497 = vunpack.c.l.b16 %v1458
        %v1498 = vunpack.c.l.b16 %v1459
        %v1499 = vunpack.c.l.b16 %v1460
        %v1500 = vunpack.c.l.b16 %v1461
        %v1501 = vunpack.c.l.b16 %v1462
        %v1502 = vunpack.c.l.b16 %v1463
        %v1503 = vpack.c.b16 %v1488, %v1487
        %v1504 = vpack.c.b16 %v1490, %v1489
        %v1505 = vpack.c.b16 %v1492, %v1491
        %v1506 = vpack.c.b16 %v1494, %v1493
        %v1507 = vpack.c.b16 %v1496, %v1495
        %v1508 = vpack.c.b16 %v1498, %v1497
        %v1509 = vpack.c.b16 %v1500, %v1499
        %v1510 = vpack.c.b16 %v1502, %v1501
        %1519 = vmatprep.subr.bf16.mxu0 0
        %1520 = vmatpush1.bf16.msra.mxu0 %v1510
        %1521 = vmatprep.subr.bf16.mxu0 0
        %1522 = vmatpush1.bf16.msra.mxu0 %v1509
        %1523 = vmatprep.subr.bf16.mxu0 0
        %1524 = vmatpush1.bf16.msra.mxu0 %v1508
        %1525 = vmatprep.subr.bf16.mxu0 0
        %1526 = vmatpush1.bf16.msra.mxu0 %v1507
        %1527 = vmatprep.subr.bf16.mxu0 0
        %1528 = vmatpush1.bf16.msra.mxu0 %v1506
        %1529 = vmatprep.subr.bf16.mxu0 0
        %1530 = vmatpush1.bf16.msra.mxu0 %v1505
        %1531 = vmatprep.subr.bf16.mxu0 0
        %1532 = vmatpush1.bf16.msra.mxu0 %v1504
        %1533 = vmatprep.subr.bf16.mxu0 0
        %1534 = vmatpush1.bf16.msra.mxu0 %v1503
        %1535 = vmatprep.subr.bf16.mxu0 0
        %1536 = vmatpush2.bf16.msra.mxu0 0
        %1537 = vmatprep.subr.bf16.mxu0 0
        %1538 = vmatpush2.bf16.msra.mxu0 0
        %1539 = vmatprep.subr.bf16.mxu0 0
        %1540 = vmatpush2.bf16.msra.mxu0 0
        %1541 = vmatprep.subr.bf16.mxu0 0
        %1542 = vmatpush2.bf16.msra.mxu0 0
        %1543 = vmatprep.subr.bf16.mxu0 0
        %1544 = vmatpush2.bf16.msra.mxu0 0
        %1545 = vmatprep.subr.bf16.mxu0 0
        %1546 = vmatpush2.bf16.msra.mxu0 0
        %1547 = vmatprep.subr.bf16.mxu0 0
        %1548 = vmatpush2.bf16.msra.mxu0 0
        %1549 = vmatprep.subr.bf16.mxu0 0
        %1550 = vmatpush2.bf16.msra.mxu0 0
        %1551 = vmatprep.mubr.bf16.mxu0 0
        %1552 = vmatmul.mubr.bf16.gmra.mxu0 %v1444
        %v1553 = vpop.f32.mrf.mxu0
        %v1554 = vadd.f32 %v1469, %v1553
        %v1555 = vpop.f32.mrf.mxu0
        %v1556 = vpop.f32.mrf.mxu0
        %v1557 = vadd.f32 %v1469, %v1556
        %v1558 = vpop.f32.mrf.mxu0
        %1559 = vmatprep.mubr.bf16.mxu0 0
        %1560 = vmatmul.mubr.bf16.gmra.mxu0 %v1445
        %v1561 = vpop.f32.mrf.mxu0
        %v1562 = vadd.f32 %v1469, %v1561
        %v1563 = vpop.f32.mrf.mxu0
        %v1564 = vpop.f32.mrf.mxu0
        %v1565 = vadd.f32 %v1469, %v1564
        %v1566 = vpop.f32.mrf.mxu0
        %1567 = vmatprep.mubr.bf16.mxu0 0
        %1568 = vmatmul.mubr.bf16.gmra.mxu0 %v1446
        %v1569 = vpop.f32.mrf.mxu0
        %v1570 = vadd.f32 %v1469, %v1569
        %v1571 = vpop.f32.mrf.mxu0
        %v1572 = vpop.f32.mrf.mxu0
        %v1573 = vadd.f32 %v1469, %v1572
        %v1574 = vpop.f32.mrf.mxu0
        %1575 = vmatprep.mubr.bf16.mxu0 0
        %1576 = vmatmul.mubr.bf16.gmra.mxu0 %v1447
        %v1577 = vpop.f32.mrf.mxu0
        %v1578 = vadd.f32 %v1469, %v1577
        %v1579 = vpop.f32.mrf.mxu0
        %v1580 = vpop.f32.mrf.mxu0
        %v1581 = vadd.f32 %v1469, %v1580
        %v1582 = vpop.f32.mrf.mxu0
        %1583 = vdwg.mxu0
        %v1584 = vld [vmem:[#allocation6] sm:$0xff]
        %v1585 = vld [vmem:[#allocation6 + $0x8] sm:$0xff]
        %v1586 = vld [vmem:[#allocation6 + $0x10] sm:$0xff]
        %v1587 = vld [vmem:[#allocation6 + $0x18] sm:$0xff]
        %v1588 = vld [vmem:[#allocation6 + $0x20] sm:$0xff]
        %v1589 = vld [vmem:[#allocation6 + $0x28] sm:$0xff]
        %v1590 = vld [vmem:[#allocation6 + $0x30] sm:$0xff]
        %v1591 = vld [vmem:[#allocation6 + $0x38] sm:$0xff]
        %v1592 = vsub.f32 %v1554, %v1584
        %v1593 = vsub.f32 %v1557, %v1585
        %v1594 = vsub.f32 %v1562, %v1586
        %v1595 = vsub.f32 %v1565, %v1587
        %v1596 = vsub.f32 %v1570, %v1588
        %v1597 = vsub.f32 %v1573, %v1589
        %v1598 = vsub.f32 %v1578, %v1590
        %v1599 = vsub.f32 %v1581, %v1591
        %v1600 = vmul.f32 %v1592, 0.5
        %v1601 = vmul.f32 %v1593, 0.5
        %v1602 = vmul.f32 %v1594, 0.5
        %v1603 = vmul.f32 %v1595, 0.5
        %v1604 = vmul.f32 %v1596, 0.5
        %v1605 = vmul.f32 %v1597, 0.5
        %v1606 = vmul.f32 %v1598, 0.5
        %v1607 = vmul.f32 %v1599, 0.5
        %v1608 = vadd.f32 %v1584, %v1600
        %v1609 = vadd.f32 %v1585, %v1601
        %v1610 = vadd.f32 %v1586, %v1602
        %v1611 = vadd.f32 %v1587, %v1603
        %v1612 = vadd.f32 %v1588, %v1604
        %v1613 = vadd.f32 %v1589, %v1605
        %v1614 = vadd.f32 %v1590, %v1606
        %v1615 = vadd.f32 %v1591, %v1607
        %vm1616 = vcmp.ge.f32.partialorder %v1608, 1.0
        %vm1617 = vcmp.ge.f32.partialorder %v1609, 1.0
        %vm1618 = vcmp.ge.f32.partialorder %v1610, 1.0
        %vm1619 = vcmp.ge.f32.partialorder %v1611, 1.0
        %vm1620 = vcmp.ge.f32.partialorder %v1612, 1.0
        %vm1621 = vcmp.ge.f32.partialorder %v1613, 1.0
        %vm1622 = vcmp.ge.f32.partialorder %v1614, 1.0
        %vm1623 = vcmp.ge.f32.partialorder %v1615, 1.0
        %v1624 = vsel %vm1616, 0.0, %v1608
        %v1625 = vsel %vm1617, 0.0, %v1609
        %v1626 = vsel %vm1618, 0.0, %v1610
        %v1627 = vsel %vm1619, 0.0, %v1611
        %v1628 = vsel %vm1620, 0.0, %v1612
        %v1629 = vsel %vm1621, 0.0, %v1613
        %v1630 = vsel %vm1622, 0.0, %v1614
        %v1631 = vsel %vm1623, 0.0, %v1615
        %1632 = vst.msk [vmem:[#allocation6] sm:$0xff] %vm531, %v1624
        %1633 = vst.msk [vmem:[#allocation6 + $0x8] sm:$0xff] %vm531, %v1625
        %1634 = vst.msk [vmem:[#allocation6 + $0x10] sm:$0xff] %vm531, %v1626
        %1635 = vst.msk [vmem:[#allocation6 + $0x18] sm:$0xff] %vm531, %v1627
        %1636 = vst.msk [vmem:[#allocation6 + $0x20] sm:$0xff] %vm531, %v1628
        %1637 = vst.msk [vmem:[#allocation6 + $0x28] sm:$0xff] %vm531, %v1629
        %1638 = vst.msk [vmem:[#allocation6 + $0x30] sm:$0xff] %vm531, %v1630
        %1639 = vst.msk [vmem:[#allocation6 + $0x38] sm:$0xff] %vm531, %v1631
        %v1640 = vsel %vm1616, 1, 0
        %v1641 = vsel %vm1617, 1, 0
        %v1642 = vsel %vm1618, 1, 0
        %v1643 = vsel %vm1619, 1, 0
        %v1644 = vsel %vm1620, 1, 0
        %v1645 = vsel %vm1621, 1, 0
        %v1646 = vsel %vm1622, 1, 0
        %v1647 = vsel %vm1623, 1, 0
        %v1648 = vcvt.s32.f32 %v1640
        %v1649 = vcvt.s32.f32 %v1641
        %v1650 = vcvt.s32.f32 %v1642
        %v1651 = vcvt.s32.f32 %v1643
        %v1652 = vcvt.s32.f32 %v1644
        %v1653 = vcvt.s32.f32 %v1645
        %v1654 = vcvt.s32.f32 %v1646
        %v1655 = vcvt.s32.f32 %v1647
        %v1656 = vadd.f32 %v1260, %v1648
        %v1657 = vadd.f32 %v1261, %v1649
        %v1658 = vadd.f32 %v1262, %v1650
        %v1659 = vadd.f32 %v1263, %v1651
        %v1660 = vadd.f32 %v1264, %v1652
        %v1661 = vadd.f32 %v1265, %v1653
        %v1662 = vadd.f32 %v1266, %v1654
        %v1663 = vadd.f32 %v1267, %v1655
        %1664 = vst.msk [vmem:[%s425] sm:$0xff] %vm531, %v1656
        %1665 = vst.msk [vmem:[%s425 + $0x8] sm:$0xff] %vm531, %v1657
        %1666 = vst.msk [vmem:[%s425 + $0x10] sm:$0xff] %vm531, %v1658
        %1667 = vst.msk [vmem:[%s425 + $0x18] sm:$0xff] %vm531, %v1659
        %1668 = vst.msk [vmem:[%s425 + $0x20] sm:$0xff] %vm531, %v1660
        %1669 = vst.msk [vmem:[%s425 + $0x28] sm:$0xff] %vm531, %v1661
        %1670 = vst.msk [vmem:[%s425 + $0x30] sm:$0xff] %vm531, %v1662
        %1671 = vst.msk [vmem:[%s425 + $0x38] sm:$0xff] %vm531, %v1663
        %s1672 = sand.u32 %s268, 1
        %s1673 = scalar_lea.sflag [#allocation10], %s1672
        %s1674 = sand.u32 %s268, 1
        %s1675 = smul.addr %s1674, 64
        %s1676 = scalar_lea.vmem [#allocation11], %s1675
        %s1677 = smul.u32 8, %s33
        %p1678 = scmp.lt.s32.totalorder %s34, 3
        %s1679 = scalar_select %p1678, %s34, 3
        %p1680 = scmp.lt.s32.totalorder %s1677, 15
        %s1681 = scalar_select %p1680, %s1677, 15
        %s1682 = smul.addr %s1679, 16
        %s1683 = sadd.s32 %s1681, %s1682
        %s1684 = smul.addr %s1683, 4
        %s1685 = scalar_lea.vmem %s11, %s1684
        // Predicated region
        $region69: #{block_forward.1} parent=59 // pred_check
          %p1686 = pneg %p278
        $region70: #{block_forward.1} parent=59 // pred_check_branch
          %1688 = sbr.rel (%p1686) target = $region72
        $region71: #{block_forward.1} parent=59 // pred_region
          %s1689 = smul.u32 8, %s33
          %s1691 = ssub.s32 1024, 1024
          %1692 = vsyncadd %s1673, %s1691
          %s1693 = smul.addr %s34, 16
          %s1694 = sadd.s32 %s1689, %s1693
          %s1695 = smul.addr %s1694, 128
          %s1696 = scalar_lea.hbm %s10, %s1695
          %s1697 = sshll.u32 %s1676, 4
          %s1698 = int_to_ptr.vmem [resolvable:$true] %s1697
          %1703 = dma.vmem_to_hbm [thread:$0]  %s1698, 1024, %s1696, %s1673, 128, 128, 8
        $region72: #{block_forward.1} parent=59 // pred_fallthru
          _
        // Predicated region
        $region73: #{block_forward.1} parent=59 // pred_check
          %p1704 = pneg %p306
        $region74: #{block_forward.1} parent=59 // pred_check_branch
          %1706 = sbr.rel (%p1704) target = $region76
        $region75: #{block_forward.1} parent=59 // pred_region
          %s1707 = smul.u32 8, %s33
        $region76: #{block_forward.1} parent=59 // pred_fallthru
          _
      $region60: #{block_forward.1} parent=5 // pred_fallthru
        _
      %p1708 = scmp.le.s32.totalorder 2, %s24
      // Predicated region
      $region77: #{block_forward.1} parent=5 // pred_check
        %p1709 = pneg %p1708
      $region78: #{block_forward.1} parent=5 // pred_check_branch
        %1711 = sbr.rel (%p1709) target = $region80
      $region79: #{block_forward.1} parent=5 // pred_region
        %s1712 = ssub.s32 %s24, 2
        // Predicated region
        $region81: #{block_forward.1} parent=79 // pred_check
          %p1713 = pneg %p284
        $region82: #{block_forward.1} parent=79 // pred_check_branch
          %1715 = sbr.rel (%p1713) target = $region84
        $region83: #{block_forward.1} parent=79 // pred_region
          %s1716 = sand.u32 %s269, 1
          %s1717 = scalar_lea.sflag [#allocation10], %s1716
          %s1718 = sand.u32 %s269, 1
          %s1719 = smul.addr %s1718, 64
          %s1720 = scalar_lea.vmem [#allocation11], %s1719
          %1721 = dma.done %s1717, 1024
        $region84: #{block_forward.1} parent=79 // pred_fallthru
          _
        // Predicated region
        $region85: #{block_forward.1} parent=79 // pred_check
          %p1722 = pneg %p312
        $region86: #{block_forward.1} parent=79 // pred_check_branch
          %1724 = sbr.rel (%p1722) target = $region88
        $region87: #{block_forward.1} parent=79 // pred_region
          %s1725 = smul.u32 8, %s35
          %p1726 = scmp.lt.s32.totalorder %s36, 3
          %s1727 = scalar_select %p1726, %s36, 3
          %p1728 = scmp.lt.s32.totalorder %s1725, 15
          %s1729 = scalar_select %p1728, %s1725, 15
          %s1730 = smul.addr %s1727, 16
          %s1731 = sadd.s32 %s1729, %s1730
          %s1732 = smul.addr %s1731, 4
          %s1733 = scalar_lea.vmem %s11, %s1732
        $region88: #{block_forward.1} parent=79 // pred_fallthru
          _
      $region80: #{block_forward.1} parent=5 // pred_fallthru
        _
    $region6: #{block_forward.1} parent=1 // loop_footer
      %s28 = sadd.s32 1, %s24
    $region7: #{block_forward.1} parent=1 // loop_footer_branch
      %23 = sbr.rel target = $region3
    $region8: #{block_forward.1} parent=1 // loop_exit
      _
    %1734 = vsyncpa [#allocation9], 1
    %s1735 = scalar_lea.sflag [#allocation9], 1
    %1736 = vsyncpa %s1735, 1
    %1737 = vsyncpa [#allocation10], 1
    %s1738 = scalar_lea.sflag [#allocation10], 1
    %1739 = vsyncpa %s1738, 1

</llo_original>
